<compile_context>
chip_gen: v7x
topology: tpu7x:2x2x1
jax: 0.10.0
libtpu: 0.0.40
codegen_flags: <defaults>
</compile_context>

<pallas_src>
import functools

import jax
import jax.numpy as jnp
from jax.experimental import pallas as pl
from jax.experimental.pallas import tpu as pltpu

LAYERS = [3, 50, 50, 50, 3]
H_PAD = 128      # hidden width zero-padded 50 -> 128 (full lane group)
OUT_ROWS = 8     # output features zero-padded 3 -> 8 (one sublane group)


def _mlp_kernel_fm(c_ref,                         # (3, tile_n)  coords, feature-major
                   w1_ref, b1_ref,                # (128, 128), (128, 1)   f32
                   w2_ref, b2_ref,                # (128, 128), (128, 1)
                   w3_ref, b3_ref,                # (128, 128), (128, 1)
                   w4_ref, b4_ref,                # (8, 128),   (8, 1)
                   o_ref,                         # (8, tile_n)
                   *, matmul_dtype):
    """Whole padded MLP forward for one batch tile, feature-major.

    Zero-padded weights/biases + tanh(0)=0 keep padded hidden rows (>=50) and
    padded output rows (>=3) exactly zero.
    """
    # ---- Layer 1 on the VPU: h[j, n] = sum_k w1t[j, k] * c[k, n] + b1[j] ----
    # (K=3 matmul is ~2% MXU-efficient; three broadcast axpy's are free-ish.)
    h = (w1_ref[:, 0:1] * c_ref[0:1, :]
         + w1_ref[:, 1:2] * c_ref[1:2, :]
         + w1_ref[:, 2:3] * c_ref[2:3, :]
         + b1_ref[...])
    h = jnp.tanh(h)

    # ---- Layers 2-4 on the MXU: (out,128) x (128,tile_n), f32 accumulation ----
    def dense(w_ref, b_ref, a):
        lhs = w_ref[...]                          # already matmul_dtype (wrapper cast)
        rhs = a.astype(matmul_dtype)              # no-op in the f32 path
        return jnp.dot(lhs, rhs, preferred_element_type=jnp.float32) + b_ref[...]

    h = jnp.tanh(dense(w2_ref, b2_ref, h))
    h = jnp.tanh(dense(w3_ref, b3_ref, h))
    # Output layer: lane-dense (8, tile_n) store; only rows [:3] are nonzero.
    o_ref[...] = dense(w4_ref, b4_ref, h).astype(o_ref.dtype)


def _pad2(a, rows, cols):
    return jnp.pad(a, ((0, rows - a.shape[0]), (0, cols - a.shape[1])))


@functools.partial(jax.jit, static_argnames=("tile_n", "use_bf16_matmul"))
def pinn_forward(x, y, t, params, tile_n=2048, use_bf16_matmul=False):
    """x, y, t: (N, 1) float32.  Returns (N, 3) float32 (u, v, p)."""
    assert tile_n % 128 == 0 and tile_n >= 128, "tile_n must be a multiple of 128"
    n = x.shape[0]
    d_out = LAYERS[-1]
    (w1, b1), (w2, b2), (w3, b3), (w4, b4) = params

    matmul_dtype = jnp.bfloat16 if use_bf16_matmul else jnp.float32

    # Feature-major (transposed) weights, zero-padded to aligned shapes.
    w1t = _pad2(w1.T, H_PAD, 128)                               # (128, 128) f32, VPU layer
    w2t = _pad2(w2.T, H_PAD, H_PAD).astype(matmul_dtype)        # (128, 128)
    w3t = _pad2(w3.T, H_PAD, H_PAD).astype(matmul_dtype)        # (128, 128)
    w4t = _pad2(w4.T, OUT_ROWS, H_PAD).astype(matmul_dtype)     # (8, 128)
    b1t = _pad2(b1.T, H_PAD, 1)                                 # (128, 1)  f32
    b2t = _pad2(b2.T, H_PAD, 1)
    b3t = _pad2(b3.T, H_PAD, 1)
    b4t = _pad2(b4.T, OUT_ROWS, 1)                              # (8, 1)

    # Pack coordinates feature-major: (3, N).  (N,1)->(1,N) is a free reshape.
    coords = jnp.concatenate(
        [x.reshape(1, -1), y.reshape(1, -1), t.reshape(1, -1)], axis=0)

    # Pad the batch so the kernel only ever sees full tiles.
    n_blocks = max(1, pl.cdiv(n, tile_n))
    n_padded = n_blocks * tile_n
    if n_padded != n:
        coords = jnp.pad(coords, ((0, 0), (0, n_padded - n)))

    def resident(arr):
        # Full-extent block, constant index_map -> fetched once, resident.
        return pl.BlockSpec(arr.shape, lambda i: (0, 0))

    kernel = functools.partial(_mlp_kernel_fm, matmul_dtype=matmul_dtype)

    out = pl.pallas_call(
        kernel,
        out_shape=jax.ShapeDtypeStruct((OUT_ROWS, n_padded), jnp.float32),
        grid=(n_blocks,),
        in_specs=[
            pl.BlockSpec((LAYERS[0], tile_n), lambda i: (0, i)),   # coords tile
            resident(w1t), resident(b1t),
            resident(w2t), resident(b2t),
            resident(w3t), resident(b3t),
            resident(w4t), resident(b4t),
        ],
        out_specs=pl.BlockSpec((OUT_ROWS, tile_n), lambda i: (0, i)),
        compiler_params=pltpu.CompilerParams(
            dimension_semantics=("parallel",)),     # megacore-shard batch tiles
    )(coords, w1t, b1t, w2t, b2t, w3t, b3t, w4t, b4t)

    # Keep only the 3 real output rows, back to batch-major (N, 3).
    return out[:d_out, :n].T


def init_params(key, layers=LAYERS):
    """Deterministic init mimicking nn.Linear default: U(-1/sqrt(fan_in), .).
    Weights stored as (in_features, out_features); biases as (1, out_features)."""
    params = []
    for i in range(len(layers) - 1):
        fan_in, fan_out = layers[i], layers[i + 1]
        key, kw, kb = jax.random.split(key, 3)
        bound = 1.0 / jnp.sqrt(fan_in)
        w = jax.random.uniform(kw, (fan_in, fan_out), jnp.float32, -bound, bound)
        b = jax.random.uniform(kb, (1, fan_out), jnp.float32, -bound, bound)
        params.append((w, b))
    return params


def pinn_reference(x, y, t, params):
    """Pure-JAX reference of the PyTorch forward."""
    h = jnp.concatenate([x, y, t], axis=1)
    (w1, b1), (w2, b2), (w3, b3), (w4, b4) = params
    h = jnp.tanh(h @ w1 + b1)
    h = jnp.tanh(h @ w2 + b2)
    h = jnp.tanh(h @ w3 + b3)
    return h @ w4 + b4


if __name__ == "__main__":
    key = jax.random.PRNGKey(0)
    k_params, kx, ky, kt = jax.random.split(key, 4)

    # Small test shapes: N=1000 (not a tile multiple -> exercises batch
    # padding), tile_n=512 -> 2 grid steps.  Production default is tile_n=2048.
    N = 1000
    TILE = 512
    x = jax.random.uniform(kx, (N, 1), jnp.float32)
    y = jax.random.uniform(ky, (N, 1), jnp.float32)
    t = jax.random.uniform(kt, (N, 1), jnp.float32)
    params = init_params(k_params)

    ref = pinn_reference(x, y, t, params)

    # f32 path (default): matches the PyTorch forward tightly.
    out = jax.block_until_ready(pinn_forward(x, y, t, params, tile_n=TILE))
    assert out.shape == (N, 3), out.shape
    assert jnp.allclose(out, ref, atol=1e-5, rtol=1e-5), \
        f"f32 max err {float(jnp.max(jnp.abs(out - ref)))}"

    # bf16-MXU path (opt-in): f32 accumulation, looser tolerance.
    out_bf16 = jax.block_until_ready(
        pinn_forward(x, y, t, params, tile_n=TILE, use_bf16_matmul=True))
    assert out_bf16.shape == (N, 3), out_bf16.shape
    assert jnp.allclose(out_bf16, ref, atol=5e-2, rtol=5e-2), \
        f"bf16 max err {float(jnp.max(jnp.abs(out_bf16 - ref)))}"

    print("KERNEL_OK")
</pallas_src>

<mosaic_0001>
module attributes {stable_mosaic.version = 11 : i64} {
  func.func @_mlp_kernel_fm(%arg0: i32, %arg1: memref<3x512xf32, #tpu.memory_space<vmem>>, %arg2: memref<128x128xf32, #tpu.memory_space<vmem>>, %arg3: memref<128x1xf32, #tpu.memory_space<vmem>>, %arg4: memref<128x128xf32, #tpu.memory_space<vmem>>, %arg5: memref<128x1xf32, #tpu.memory_space<vmem>>, %arg6: memref<128x128xf32, #tpu.memory_space<vmem>>, %arg7: memref<128x1xf32, #tpu.memory_space<vmem>>, %arg8: memref<8x128xf32, #tpu.memory_space<vmem>>, %arg9: memref<8x1xf32, #tpu.memory_space<vmem>>, %arg10: memref<8x512xf32, #tpu.memory_space<vmem>>) attributes {dimension_semantics = [#tpu.dimension_semantics<parallel>], iteration_bounds = array<i64: 2>, scalar_prefetch = 0 : i64, scratch_operands = 0 : i64, tpu.core_type = #tpu.core_type<tc>, window_params = [{transform_indices = @transform_0, window_bounds = array<i64: 3, 512>}, {pipeline_mode = #tpu.pipeline_mode<synchronous>, transform_indices = @transform_1, window_bounds = array<i64: 128, 128>}, {pipeline_mode = #tpu.pipeline_mode<synchronous>, transform_indices = @transform_2, window_bounds = array<i64: 128, 1>}, {pipeline_mode = #tpu.pipeline_mode<synchronous>, transform_indices = @transform_3, window_bounds = array<i64: 128, 128>}, {pipeline_mode = #tpu.pipeline_mode<synchronous>, transform_indices = @transform_4, window_bounds = array<i64: 128, 1>}, {pipeline_mode = #tpu.pipeline_mode<synchronous>, transform_indices = @transform_5, window_bounds = array<i64: 128, 128>}, {pipeline_mode = #tpu.pipeline_mode<synchronous>, transform_indices = @transform_6, window_bounds = array<i64: 128, 1>}, {pipeline_mode = #tpu.pipeline_mode<synchronous>, transform_indices = @transform_7, window_bounds = array<i64: 8, 128>}, {pipeline_mode = #tpu.pipeline_mode<synchronous>, transform_indices = @transform_8, window_bounds = array<i64: 8, 1>}, {transform_indices = @transform_9, window_bounds = array<i64: 8, 512>}]} {
    %c0 = arith.constant 0 : index
    %c0_0 = arith.constant 0 : index
    %0 = vector.load %arg2[%c0, %c0_0] : memref<128x128xf32, #tpu.memory_space<vmem>>, vector<128x1xf32>
    %c0_1 = arith.constant 0 : index
    %c0_2 = arith.constant 0 : index
    %1 = vector.load %arg1[%c0_1, %c0_2] : memref<3x512xf32, #tpu.memory_space<vmem>>, vector<1x512xf32>
    %2 = vector.broadcast %0 : vector<128x1xf32> to vector<128x512xf32>
    %3 = vector.broadcast %1 : vector<1x512xf32> to vector<128x512xf32>
    %4 = arith.mulf %2, %3 : vector<128x512xf32>
    %c0_3 = arith.constant 0 : index
    %c1 = arith.constant 1 : index
    %5 = vector.load %arg2[%c0_3, %c1] : memref<128x128xf32, #tpu.memory_space<vmem>>, vector<128x1xf32>
    %c1_4 = arith.constant 1 : index
    %c0_5 = arith.constant 0 : index
    %6 = vector.load %arg1[%c1_4, %c0_5] : memref<3x512xf32, #tpu.memory_space<vmem>>, vector<1x512xf32>
    %7 = vector.broadcast %5 : vector<128x1xf32> to vector<128x512xf32>
    %8 = vector.broadcast %6 : vector<1x512xf32> to vector<128x512xf32>
    %9 = arith.mulf %7, %8 : vector<128x512xf32>
    %10 = arith.addf %4, %9 : vector<128x512xf32>
    %c0_6 = arith.constant 0 : index
    %c2 = arith.constant 2 : index
    %11 = vector.load %arg2[%c0_6, %c2] : memref<128x128xf32, #tpu.memory_space<vmem>>, vector<128x1xf32>
    %c2_7 = arith.constant 2 : index
    %c0_8 = arith.constant 0 : index
    %12 = vector.load %arg1[%c2_7, %c0_8] : memref<3x512xf32, #tpu.memory_space<vmem>>, vector<1x512xf32>
    %13 = vector.broadcast %11 : vector<128x1xf32> to vector<128x512xf32>
    %14 = vector.broadcast %12 : vector<1x512xf32> to vector<128x512xf32>
    %15 = arith.mulf %13, %14 : vector<128x512xf32>
    %16 = arith.addf %10, %15 : vector<128x512xf32>
    %c0_9 = arith.constant 0 : index
    %c0_10 = arith.constant 0 : index
    %17 = vector.load %arg3[%c0_9, %c0_10] : memref<128x1xf32, #tpu.memory_space<vmem>>, vector<128x1xf32>
    %18 = vector.broadcast %17 : vector<128x1xf32> to vector<128x512xf32>
    %19 = arith.addf %16, %18 : vector<128x512xf32>
    %20 = math.tanh %19 : vector<128x512xf32>
    %c0_11 = arith.constant 0 : index
    %c0_12 = arith.constant 0 : index
    %21 = vector.load %arg4[%c0_11, %c0_12] : memref<128x128xf32, #tpu.memory_space<vmem>>, vector<128x128xf32>
    %cst = arith.constant dense<0.000000e+00> : vector<128x512xf32>
    %22 = tpu.matmul %21, %20, %cst {dimension_numbers = #tpu.dot_dimension_numbers<[1], [0], [0], [1], [0, 0, 1, 1], [], []>} : vector<128x128xf32>, vector<128x512xf32>, vector<128x512xf32> -> vector<128x512xf32>
    %c0_13 = arith.constant 0 : index
    %c0_14 = arith.constant 0 : index
    %23 = vector.load %arg5[%c0_13, %c0_14] : memref<128x1xf32, #tpu.memory_space<vmem>>, vector<128x1xf32>
    %24 = vector.broadcast %23 : vector<128x1xf32> to vector<128x512xf32>
    %25 = arith.addf %22, %24 : vector<128x512xf32>
    %26 = math.tanh %25 : vector<128x512xf32>
    %c0_15 = arith.constant 0 : index
    %c0_16 = arith.constant 0 : index
    %27 = vector.load %arg6[%c0_15, %c0_16] : memref<128x128xf32, #tpu.memory_space<vmem>>, vector<128x128xf32>
    %cst_17 = arith.constant dense<0.000000e+00> : vector<128x512xf32>
    %28 = tpu.matmul %27, %26, %cst_17 {dimension_numbers = #tpu.dot_dimension_numbers<[1], [0], [0], [1], [0, 0, 1, 1], [], []>} : vector<128x128xf32>, vector<128x512xf32>, vector<128x512xf32> -> vector<128x512xf32>
    %c0_18 = arith.constant 0 : index
    %c0_19 = arith.constant 0 : index
    %29 = vector.load %arg7[%c0_18, %c0_19] : memref<128x1xf32, #tpu.memory_space<vmem>>, vector<128x1xf32>
    %30 = vector.broadcast %29 : vector<128x1xf32> to vector<128x512xf32>
    %31 = arith.addf %28, %30 : vector<128x512xf32>
    %32 = math.tanh %31 : vector<128x512xf32>
    %c0_20 = arith.constant 0 : index
    %c0_21 = arith.constant 0 : index
    %33 = vector.load %arg8[%c0_20, %c0_21] : memref<8x128xf32, #tpu.memory_space<vmem>>, vector<8x128xf32>
    %cst_22 = arith.constant dense<0.000000e+00> : vector<8x512xf32>
    %34 = tpu.matmul %33, %32, %cst_22 {dimension_numbers = #tpu.dot_dimension_numbers<[1], [0], [0], [1], [0, 0, 1, 1], [], []>} : vector<8x128xf32>, vector<128x512xf32>, vector<8x512xf32> -> vector<8x512xf32>
    %c0_23 = arith.constant 0 : index
    %c0_24 = arith.constant 0 : index
    %35 = vector.load %arg9[%c0_23, %c0_24] : memref<8x1xf32, #tpu.memory_space<vmem>>, vector<8x1xf32>
    %36 = vector.broadcast %35 : vector<8x1xf32> to vector<8x512xf32>
    %37 = arith.addf %34, %36 : vector<8x512xf32>
    %c0_25 = arith.constant 0 : index
    %c0_26 = arith.constant 0 : index
    %38 = vector.load %arg10[%c0_25, %c0_26] : memref<8x512xf32, #tpu.memory_space<vmem>>, vector<8x512xf32>
    tpu.vector_store %arg10[%c0_25, %c0_26], %37 {strides = array<i32>} : memref<8x512xf32, #tpu.memory_space<vmem>>, vector<8x512xf32>,
    return
  }
  func.func @transform_0(%arg0: i32) -> (i32, i32) {
    %c0_i32 = arith.constant 0 : i32
    %c0_i32_0 = arith.constant 0 : i32
    return %c0_i32, %arg0 : i32, i32
  }
  func.func @transform_1(%arg0: i32) -> (i32, i32) {
    %c0_i32 = arith.constant 0 : i32
    %c0_i32_0 = arith.constant 0 : i32
    %c0_i32_1 = arith.constant 0 : i32
    return %c0_i32, %c0_i32_0 : i32, i32
  }
  func.func @transform_2(%arg0: i32) -> (i32, i32) {
    %c0_i32 = arith.constant 0 : i32
    %c0_i32_0 = arith.constant 0 : i32
    %c0_i32_1 = arith.constant 0 : i32
    return %c0_i32, %c0_i32_0 : i32, i32
  }
  func.func @transform_3(%arg0: i32) -> (i32, i32) {
    %c0_i32 = arith.constant 0 : i32
    %c0_i32_0 = arith.constant 0 : i32
    %c0_i32_1 = arith.constant 0 : i32
    return %c0_i32, %c0_i32_0 : i32, i32
  }
  func.func @transform_4(%arg0: i32) -> (i32, i32) {
    %c0_i32 = arith.constant 0 : i32
    %c0_i32_0 = arith.constant 0 : i32
    %c0_i32_1 = arith.constant 0 : i32
    return %c0_i32, %c0_i32_0 : i32, i32
  }
  func.func @transform_5(%arg0: i32) -> (i32, i32) {
    %c0_i32 = arith.constant 0 : i32
    %c0_i32_0 = arith.constant 0 : i32
    %c0_i32_1 = arith.constant 0 : i32
    return %c0_i32, %c0_i32_0 : i32, i32
  }
  func.func @transform_6(%arg0: i32) -> (i32, i32) {
    %c0_i32 = arith.constant 0 : i32
    %c0_i32_0 = arith.constant 0 : i32
    %c0_i32_1 = arith.constant 0 : i32
    return %c0_i32, %c0_i32_0 : i32, i32
  }
  func.func @transform_7(%arg0: i32) -> (i32, i32) {
    %c0_i32 = arith.constant 0 : i32
    %c0_i32_0 = arith.constant 0 : i32
    %c0_i32_1 = arith.constant 0 : i32
    return %c0_i32, %c0_i32_0 : i32, i32
  }
  func.func @transform_8(%arg0: i32) -> (i32, i32) {
    %c0_i32 = arith.constant 0 : i32
    %c0_i32_0 = arith.constant 0 : i32
    %c0_i32_1 = arith.constant 0 : i32
    return %c0_i32, %c0_i32_0 : i32, i32
  }
  func.func @transform_9(%arg0: i32) -> (i32, i32) {
    %c0_i32 = arith.constant 0 : i32
    %c0_i32_0 = arith.constant 0 : i32
    return %c0_i32, %arg0 : i32, i32
  }
}

</mosaic_0001>

<llo_original>
// kernel: pinn_forward.1
$region0: #{pinn_forward.1}
  #allocation0 [shape = 'u32[]', space=smem, size = 0x4, offset = 0x4, fixed_abs, tag = 'smem constant byte address 0x4 - core index']
  #allocation1 [shape = 'u32[144,128]{1,0:T(1,128)}', space=vmem, size = 0x12000, scoped, tag = 'internal scratch']
  %s0 = inlined_call_operand.vmem [shape: f32[3,1024], index: 0, kind: input, shape index: {}]
  %s1 = inlined_call_operand.vmem [shape: f32[128,128], index: 1, kind: input, shape index: {}]
  %s2 = inlined_call_operand.vmem [shape: f32[128,1], index: 2, kind: input, shape index: {}]
  %s3 = inlined_call_operand.vmem [shape: f32[128,128], index: 3, kind: input, shape index: {}]
  %s4 = inlined_call_operand.vmem [shape: f32[128,1], index: 4, kind: input, shape index: {}]
  %s5 = inlined_call_operand.vmem [shape: f32[128,128], index: 5, kind: input, shape index: {}]
  %s6 = inlined_call_operand.vmem [shape: f32[128,1], index: 6, kind: input, shape index: {}]
  %s7 = inlined_call_operand.vmem [shape: f32[8,128], index: 7, kind: input, shape index: {}]
  %s8 = inlined_call_operand.vmem [shape: f32[8,1], index: 8, kind: input, shape index: {}]
  %s9 = inlined_call_operand.vmem [shape: f32[8,1024], index: 9, kind: output, shape index: {}]
  %s10 = sld [smem:[#allocation0]]
  $region69: #{pinn_forward.1} parent=0
    _
  %s12 = ssub.s32 1, %s10
  %s13 = scalar_select 0, %s12, %s10
  loop: start=0, step=1, limit=4
  $region2: #{pinn_forward.1} parent=0 // loop_pre_header
    _
  $region3: #{pinn_forward.1} parent=0 // loop_header
    %s15 = sphi 0, %s19
    %p16 = scmp.ge.s32.totalorder %s15, 4
    %s25 = sphi 0, %s27
    %s28 = sphi 0, %s25
    %s29 = sphi 0, %s28
    %s45 = sphi 0, %s29
    %s49 = sphi 0, %s49
    %s51 = sphi 0, %s49
    %s52 = sphi 0, %s51
    %s66 = sphi 0, %s52
    %s70 = sphi 0, %s70
    %s72 = sphi 0, %s70
    %s73 = sphi 0, %s72
    %s87 = sphi 0, %s73
    %s91 = sphi 0, %s91
    %s93 = sphi 0, %s91
    %s94 = sphi 0, %s93
    %s108 = sphi 0, %s94
    %s112 = sphi 0, %s112
    %s114 = sphi 0, %s112
    %s115 = sphi 0, %s114
    %s129 = sphi 0, %s115
    %s133 = sphi 0, %s133
    %s135 = sphi 0, %s133
    %s136 = sphi 0, %s135
    %s150 = sphi 0, %s136
    %s154 = sphi 0, %s154
    %s156 = sphi 0, %s154
    %s157 = sphi 0, %s156
    %s171 = sphi 0, %s157
    %s175 = sphi 0, %s175
    %s177 = sphi 0, %s175
    %s178 = sphi 0, %s177
    %s192 = sphi 0, %s178
    %s196 = sphi 0, %s196
    %s198 = sphi 0, %s196
    %s199 = sphi 0, %s198
    %s213 = sphi 0, %s199
    %s219 = sphi 0, %s221
    %s222 = sphi 0, %s219
    %s223 = sphi 0, %s222
    %s239 = sphi 0, %s223
  $region4: #{pinn_forward.1} parent=0 // loop_header_branch
    %18 = sbr.rel (%p16) target = $region8
  $region5: #{pinn_forward.1} parent=0 // loop_body
    %s20 = ssub.s32 %s15, 1
    %s21 = ssub.s32 %s15, 2
    %s22 = sadd.s32 %s15, 1
    %s23 = ssub.s32 %s15, %s22
    %p24 = scmp.eq.s32.totalorder %s23, 0
    %s26 = sadd.s32 %s25, 1
    %s27 = scalar_select %p24, %s25, %s26
    %p30 = pneg %p24
    %p31 = scmp.eq.s32.totalorder %s15, 1
    %p32 = por %p30, %p31
    %p33 = scmp.ne.s32.totalorder %s25, %s28
    %p34 = scmp.eq.s32.totalorder %s15, 0
    %p35 = por %p33, %p34
    %p36 = scmp.ne.s32.totalorder %s25, %s28
    %p37 = scmp.eq.s32.totalorder %s20, 1
    %p38 = por %p36, %p37
    %p39 = scmp.ne.s32.totalorder %s28, %s29
    %p40 = scmp.eq.s32.totalorder %s20, 0
    %p41 = por %p39, %p40
    %p42 = scmp.ne.s32.totalorder %s28, %s29
    %p43 = scmp.eq.s32.totalorder %s21, 1
    %p44 = por %p42, %p43
    %p46 = scmp.ne.s32.totalorder %s29, %s45
    %p47 = scmp.eq.s32.totalorder %s21, 0
    %p48 = por %p46, %p47
    %s50 = sadd.s32 %s49, 1
    %p53 = scmp.eq.s32.totalorder %s15, 1
    %p54 = scmp.ne.s32.totalorder %s49, %s51
    %p55 = scmp.eq.s32.totalorder %s15, 0
    %p56 = por %p54, %p55
    %p57 = scmp.ne.s32.totalorder %s49, %s51
    %p58 = scmp.eq.s32.totalorder %s20, 1
    %p59 = por %p57, %p58
    %p60 = scmp.ne.s32.totalorder %s51, %s52
    %p61 = scmp.eq.s32.totalorder %s20, 0
    %p62 = por %p60, %p61
    %p63 = scmp.ne.s32.totalorder %s51, %s52
    %p64 = scmp.eq.s32.totalorder %s21, 1
    %p65 = por %p63, %p64
    %p67 = scmp.ne.s32.totalorder %s52, %s66
    %p68 = scmp.eq.s32.totalorder %s21, 0
    %p69 = por %p67, %p68
    %s71 = sadd.s32 %s70, 1
    %p74 = scmp.eq.s32.totalorder %s15, 1
    %p75 = scmp.ne.s32.totalorder %s70, %s72
    %p76 = scmp.eq.s32.totalorder %s15, 0
    %p77 = por %p75, %p76
    %p78 = scmp.ne.s32.totalorder %s70, %s72
    %p79 = scmp.eq.s32.totalorder %s20, 1
    %p80 = por %p78, %p79
    %p81 = scmp.ne.s32.totalorder %s72, %s73
    %p82 = scmp.eq.s32.totalorder %s20, 0
    %p83 = por %p81, %p82
    %p84 = scmp.ne.s32.totalorder %s72, %s73
    %p85 = scmp.eq.s32.totalorder %s21, 1
    %p86 = por %p84, %p85
    %p88 = scmp.ne.s32.totalorder %s73, %s87
    %p89 = scmp.eq.s32.totalorder %s21, 0
    %p90 = por %p88, %p89
    %s92 = sadd.s32 %s91, 1
    %p95 = scmp.eq.s32.totalorder %s15, 1
    %p96 = scmp.ne.s32.totalorder %s91, %s93
    %p97 = scmp.eq.s32.totalorder %s15, 0
    %p98 = por %p96, %p97
    %p99 = scmp.ne.s32.totalorder %s91, %s93
    %p100 = scmp.eq.s32.totalorder %s20, 1
    %p101 = por %p99, %p100
    %p102 = scmp.ne.s32.totalorder %s93, %s94
    %p103 = scmp.eq.s32.totalorder %s20, 0
    %p104 = por %p102, %p103
    %p105 = scmp.ne.s32.totalorder %s93, %s94
    %p106 = scmp.eq.s32.totalorder %s21, 1
    %p107 = por %p105, %p106
    %p109 = scmp.ne.s32.totalorder %s94, %s108
    %p110 = scmp.eq.s32.totalorder %s21, 0
    %p111 = por %p109, %p110
    %s113 = sadd.s32 %s112, 1
    %p116 = scmp.eq.s32.totalorder %s15, 1
    %p117 = scmp.ne.s32.totalorder %s112, %s114
    %p118 = scmp.eq.s32.totalorder %s15, 0
    %p119 = por %p117, %p118
    %p120 = scmp.ne.s32.totalorder %s112, %s114
    %p121 = scmp.eq.s32.totalorder %s20, 1
    %p122 = por %p120, %p121
    %p123 = scmp.ne.s32.totalorder %s114, %s115
    %p124 = scmp.eq.s32.totalorder %s20, 0
    %p125 = por %p123, %p124
    %p126 = scmp.ne.s32.totalorder %s114, %s115
    %p127 = scmp.eq.s32.totalorder %s21, 1
    %p128 = por %p126, %p127
    %p130 = scmp.ne.s32.totalorder %s115, %s129
    %p131 = scmp.eq.s32.totalorder %s21, 0
    %p132 = por %p130, %p131
    %s134 = sadd.s32 %s133, 1
    %p137 = scmp.eq.s32.totalorder %s15, 1
    %p138 = scmp.ne.s32.totalorder %s133, %s135
    %p139 = scmp.eq.s32.totalorder %s15, 0
    %p140 = por %p138, %p139
    %p141 = scmp.ne.s32.totalorder %s133, %s135
    %p142 = scmp.eq.s32.totalorder %s20, 1
    %p143 = por %p141, %p142
    %p144 = scmp.ne.s32.totalorder %s135, %s136
    %p145 = scmp.eq.s32.totalorder %s20, 0
    %p146 = por %p144, %p145
    %p147 = scmp.ne.s32.totalorder %s135, %s136
    %p148 = scmp.eq.s32.totalorder %s21, 1
    %p149 = por %p147, %p148
    %p151 = scmp.ne.s32.totalorder %s136, %s150
    %p152 = scmp.eq.s32.totalorder %s21, 0
    %p153 = por %p151, %p152
    %s155 = sadd.s32 %s154, 1
    %p158 = scmp.eq.s32.totalorder %s15, 1
    %p159 = scmp.ne.s32.totalorder %s154, %s156
    %p160 = scmp.eq.s32.totalorder %s15, 0
    %p161 = por %p159, %p160
    %p162 = scmp.ne.s32.totalorder %s154, %s156
    %p163 = scmp.eq.s32.totalorder %s20, 1
    %p164 = por %p162, %p163
    %p165 = scmp.ne.s32.totalorder %s156, %s157
    %p166 = scmp.eq.s32.totalorder %s20, 0
    %p167 = por %p165, %p166
    %p168 = scmp.ne.s32.totalorder %s156, %s157
    %p169 = scmp.eq.s32.totalorder %s21, 1
    %p170 = por %p168, %p169
    %p172 = scmp.ne.s32.totalorder %s157, %s171
    %p173 = scmp.eq.s32.totalorder %s21, 0
    %p174 = por %p172, %p173
    %s176 = sadd.s32 %s175, 1
    %p179 = scmp.eq.s32.totalorder %s15, 1
    %p180 = scmp.ne.s32.totalorder %s175, %s177
    %p181 = scmp.eq.s32.totalorder %s15, 0
    %p182 = por %p180, %p181
    %p183 = scmp.ne.s32.totalorder %s175, %s177
    %p184 = scmp.eq.s32.totalorder %s20, 1
    %p185 = por %p183, %p184
    %p186 = scmp.ne.s32.totalorder %s177, %s178
    %p187 = scmp.eq.s32.totalorder %s20, 0
    %p188 = por %p186, %p187
    %p189 = scmp.ne.s32.totalorder %s177, %s178
    %p190 = scmp.eq.s32.totalorder %s21, 1
    %p191 = por %p189, %p190
    %p193 = scmp.ne.s32.totalorder %s178, %s192
    %p194 = scmp.eq.s32.totalorder %s21, 0
    %p195 = por %p193, %p194
    %s197 = sadd.s32 %s196, 1
    %p200 = scmp.eq.s32.totalorder %s15, 1
    %p201 = scmp.ne.s32.totalorder %s196, %s198
    %p202 = scmp.eq.s32.totalorder %s15, 0
    %p203 = por %p201, %p202
    %p204 = scmp.ne.s32.totalorder %s196, %s198
    %p205 = scmp.eq.s32.totalorder %s20, 1
    %p206 = por %p204, %p205
    %p207 = scmp.ne.s32.totalorder %s198, %s199
    %p208 = scmp.eq.s32.totalorder %s20, 0
    %p209 = por %p207, %p208
    %p210 = scmp.ne.s32.totalorder %s198, %s199
    %p211 = scmp.eq.s32.totalorder %s21, 1
    %p212 = por %p210, %p211
    %p214 = scmp.ne.s32.totalorder %s199, %s213
    %p215 = scmp.eq.s32.totalorder %s21, 0
    %p216 = por %p214, %p215
    %s217 = ssub.s32 %s15, %s22
    %p218 = scmp.eq.s32.totalorder %s217, 0
    %s220 = sadd.s32 %s219, 1
    %s221 = scalar_select %p218, %s219, %s220
    %p224 = pneg %p218
    %p225 = scmp.eq.s32.totalorder %s15, 1
    %p226 = por %p224, %p225
    %p227 = scmp.ne.s32.totalorder %s219, %s222
    %p228 = scmp.eq.s32.totalorder %s15, 0
    %p229 = por %p227, %p228
    %p230 = scmp.ne.s32.totalorder %s219, %s222
    %p231 = scmp.eq.s32.totalorder %s20, 1
    %p232 = por %p230, %p231
    %p233 = scmp.ne.s32.totalorder %s222, %s223
    %p234 = scmp.eq.s32.totalorder %s20, 0
    %p235 = por %p233, %p234
    %p236 = scmp.ne.s32.totalorder %s222, %s223
    %p237 = scmp.eq.s32.totalorder %s21, 1
    %p238 = por %p236, %p237
    %p240 = scmp.ne.s32.totalorder %s223, %s239
    %p241 = scmp.eq.s32.totalorder %s21, 0
    %p242 = por %p240, %p241
    %p243 = scmp.le.s32.totalorder 1, %s15
    %p244 = scmp.lt.s32.totalorder %s15, 3
    %p245 = pnand %p243, %p244
    %p246 = pneg %p245
    // Predicated region
    $region9: #{pinn_forward.1} parent=5 // pred_check
      _
    $region10: #{pinn_forward.1} parent=5 // pred_check_branch
      %248 = sbr.rel (%p245) target = $region12
    $region11: #{pinn_forward.1} parent=5 // pred_region
      %s249 = ssub.s32 %s15, 1
      // Predicated region
      $region13: #{pinn_forward.1} parent=11 // pred_check
        %p250 = pneg %p62
      $region14: #{pinn_forward.1} parent=11 // pred_check_branch
        %252 = sbr.rel (%p250) target = $region16
      $region15: #{pinn_forward.1} parent=11 // pred_region
        _
      $region16: #{pinn_forward.1} parent=11 // pred_fallthru
        _
      // Predicated region
      $region17: #{pinn_forward.1} parent=11 // pred_check
        %p253 = pneg %p83
      $region18: #{pinn_forward.1} parent=11 // pred_check_branch
        %255 = sbr.rel (%p253) target = $region20
      $region19: #{pinn_forward.1} parent=11 // pred_region
        _
      $region20: #{pinn_forward.1} parent=11 // pred_fallthru
        _
      // Predicated region
      $region21: #{pinn_forward.1} parent=11 // pred_check
        %p256 = pneg %p104
      $region22: #{pinn_forward.1} parent=11 // pred_check_branch
        %258 = sbr.rel (%p256) target = $region24
      $region23: #{pinn_forward.1} parent=11 // pred_region
        _
      $region24: #{pinn_forward.1} parent=11 // pred_fallthru
        _
      // Predicated region
      $region25: #{pinn_forward.1} parent=11 // pred_check
        %p259 = pneg %p125
      $region26: #{pinn_forward.1} parent=11 // pred_check_branch
        %261 = sbr.rel (%p259) target = $region28
      $region27: #{pinn_forward.1} parent=11 // pred_region
        _
      $region28: #{pinn_forward.1} parent=11 // pred_fallthru
        _
      // Predicated region
      $region29: #{pinn_forward.1} parent=11 // pred_check
        %p262 = pneg %p146
      $region30: #{pinn_forward.1} parent=11 // pred_check_branch
        %264 = sbr.rel (%p262) target = $region32
      $region31: #{pinn_forward.1} parent=11 // pred_region
        _
      $region32: #{pinn_forward.1} parent=11 // pred_fallthru
        _
      // Predicated region
      $region33: #{pinn_forward.1} parent=11 // pred_check
        %p265 = pneg %p167
      $region34: #{pinn_forward.1} parent=11 // pred_check_branch
        %267 = sbr.rel (%p265) target = $region36
      $region35: #{pinn_forward.1} parent=11 // pred_region
        _
      $region36: #{pinn_forward.1} parent=11 // pred_fallthru
        _
      // Predicated region
      $region37: #{pinn_forward.1} parent=11 // pred_check
        %p268 = pneg %p188
      $region38: #{pinn_forward.1} parent=11 // pred_check_branch
        %270 = sbr.rel (%p268) target = $region40
      $region39: #{pinn_forward.1} parent=11 // pred_region
        _
      $region40: #{pinn_forward.1} parent=11 // pred_fallthru
        _
      // Predicated region
      $region41: #{pinn_forward.1} parent=11 // pred_check
        %p271 = pneg %p209
      $region42: #{pinn_forward.1} parent=11 // pred_check_branch
        %273 = sbr.rel (%p271) target = $region44
      $region43: #{pinn_forward.1} parent=11 // pred_region
        _
      $region44: #{pinn_forward.1} parent=11 // pred_fallthru
        _
    $region12: #{pinn_forward.1} parent=5 // pred_fallthru
      _
    %p274 = scmp.lt.s32.totalorder %s15, 2
    // Predicated region
    $region45: #{pinn_forward.1} parent=5 // pred_check
      %p275 = pneg %p274
    $region46: #{pinn_forward.1} parent=5 // pred_check_branch
      %277 = sbr.rel (%p275) target = $region48
    $region47: #{pinn_forward.1} parent=5 // pred_region
      // Predicated region
      $region49: #{pinn_forward.1} parent=47 // pred_check
        %p278 = pneg %p35
      $region50: #{pinn_forward.1} parent=47 // pred_check_branch
        %280 = sbr.rel (%p278) target = $region52
      $region51: #{pinn_forward.1} parent=47 // pred_region
        %s281 = smul.u32 4, %s15
        %p282 = scmp.lt.s32.totalorder %s281, 7
        %s283 = scalar_select %p282, %s281, 7
        %s284 = smul.addr %s283, 4
        %s285 = scalar_lea.vmem %s0, %s284
        %s286 = smul.u32 4, %s15
      $region52: #{pinn_forward.1} parent=47 // pred_fallthru
        _
    $region48: #{pinn_forward.1} parent=5 // pred_fallthru
      _
    %p287 = scmp.le.s32.totalorder 1, %s15
    %p288 = scmp.lt.s32.totalorder %s15, 3
    %p289 = pnand %p287, %p288
    %p290 = pneg %p289
    // Predicated region
    $region53: #{pinn_forward.1} parent=5 // pred_check
      _
    $region54: #{pinn_forward.1} parent=5 // pred_check_branch
      %292 = sbr.rel (%p289) target = $region56
    $region55: #{pinn_forward.1} parent=5 // pred_region
      %s293 = ssub.s32 %s15, 1
      %s294 = smul.u32 4, %s20
      %p295 = scmp.lt.s32.totalorder %s294, 7
      %s296 = scalar_select %p295, %s294, 7
      %s297 = smul.addr %s296, 4
      %s298 = scalar_lea.vmem %s0, %s297
      %p299 = pneg %p41
      %p300 = pneg %p38
      %p301 = pneg %p62
      %p302 = pneg %p59
      %p303 = pneg %p83
      %p304 = pneg %p80
      %p305 = pneg %p104
      %p306 = pneg %p101
      %p307 = pneg %p125
      %p308 = pneg %p122
      %p309 = pneg %p146
      %p310 = pneg %p143
      %p311 = pneg %p167
      %p312 = pneg %p164
      %p313 = pneg %p188
      %p314 = pneg %p185
      %p315 = pneg %p209
      %p316 = pneg %p206
      %p317 = pneg %p235
      %p318 = pneg %p232
      %s319 = smul.u32 4, %s20
      %p320 = scmp.lt.s32.totalorder %s319, 7
      %s321 = scalar_select %p320, %s319, 7
      %s322 = smul.addr %s321, 8
      %s323 = scalar_lea.vmem %s9, %s322
      %s324 = smul.u32 4, %s20
      %p325 = scmp.lt.s32.totalorder %s324, 7
      %s326 = scalar_select %p325, %s324, 7
      %s327 = smul.addr %s326, 4
      %s328 = scalar_lea.vmem %s0, %s327
      %s329 = smul.u32 4, %s20
      %s330 = smul.u32 4, %s20
      %p331 = scmp.lt.s32.totalorder %s330, 7
      %s332 = scalar_select %p331, %s330, 7
      %s333 = smul.addr %s332, 8
      %s334 = scalar_lea.vmem %s9, %s333
      %s335 = smul.u32 4, %s20
      %v336 = vld [vmem:[%s1] sm:$0xff]
      %v337 = vld [vmem:[%s1 + $0x8] sm:$0xff]
      %v338 = vld [vmem:[%s1 + $0x10] sm:$0xff]
      %v339 = vld [vmem:[%s1 + $0x18] sm:$0xff]
      %v340 = vld [vmem:[%s1 + $0x20] sm:$0xff]
      %v341 = vld [vmem:[%s1 + $0x28] sm:$0xff]
      %v342 = vld [vmem:[%s1 + $0x30] sm:$0xff]
      %v343 = vld [vmem:[%s1 + $0x38] sm:$0xff]
      %v344 = vld [vmem:[%s1 + $0x40] sm:$0xff]
      %v345 = vld [vmem:[%s1 + $0x48] sm:$0xff]
      %v346 = vld [vmem:[%s1 + $0x50] sm:$0xff]
      %v347 = vld [vmem:[%s1 + $0x58] sm:$0xff]
      %v348 = vld [vmem:[%s1 + $0x60] sm:$0xff]
      %v349 = vld [vmem:[%s1 + $0x68] sm:$0xff]
      %v350 = vld [vmem:[%s1 + $0x70] sm:$0xff]
      %v351 = vld [vmem:[%s1 + $0x78] sm:$0xff]
      %v352 = vld [vmem:[%s328] ss:$4 sm:$0xf]
      %354 = vset.pattern.permute.xlu0 0
      %355 = vperm.xlu0 %354, %v336
      %v356 = vpop.permute.xlu0 %355
      %359 = vset.pattern.permute.xlu0 0
      %360 = vperm.xlu0 %359, %v337
      %v361 = vpop.permute.xlu0 %360
      %364 = vset.pattern.permute.xlu0 0
      %365 = vperm.xlu0 %364, %v338
      %v366 = vpop.permute.xlu0 %365
      %369 = vset.pattern.permute.xlu0 0
      %370 = vperm.xlu0 %369, %v339
      %v371 = vpop.permute.xlu0 %370
      %374 = vset.pattern.permute.xlu0 0
      %375 = vperm.xlu0 %374, %v340
      %v376 = vpop.permute.xlu0 %375
      %379 = vset.pattern.permute.xlu0 0
      %380 = vperm.xlu0 %379, %v341
      %v381 = vpop.permute.xlu0 %380
      %384 = vset.pattern.permute.xlu0 0
      %385 = vperm.xlu0 %384, %v342
      %v386 = vpop.permute.xlu0 %385
      %389 = vset.pattern.permute.xlu0 0
      %390 = vperm.xlu0 %389, %v343
      %v391 = vpop.permute.xlu0 %390
      %394 = vset.pattern.permute.xlu0 0
      %395 = vperm.xlu0 %394, %v344
      %v396 = vpop.permute.xlu0 %395
      %399 = vset.pattern.permute.xlu0 0
      %400 = vperm.xlu0 %399, %v345
      %v401 = vpop.permute.xlu0 %400
      %404 = vset.pattern.permute.xlu0 0
      %405 = vperm.xlu0 %404, %v346
      %v406 = vpop.permute.xlu0 %405
      %409 = vset.pattern.permute.xlu0 0
      %410 = vperm.xlu0 %409, %v347
      %v411 = vpop.permute.xlu0 %410
      %414 = vset.pattern.permute.xlu0 0
      %415 = vperm.xlu0 %414, %v348
      %v416 = vpop.permute.xlu0 %415
      %419 = vset.pattern.permute.xlu0 0
      %420 = vperm.xlu0 %419, %v349
      %v421 = vpop.permute.xlu0 %420
      %424 = vset.pattern.permute.xlu0 0
      %425 = vperm.xlu0 %424, %v350
      %v426 = vpop.permute.xlu0 %425
      %429 = vset.pattern.permute.xlu0 0
      %430 = vperm.xlu0 %429, %v351
      %v431 = vpop.permute.xlu0 %430
      %v434 = vlaneseq
      %v435 = vshrl.u32 %v434, 7
      %v436 = vsub.s32 0, %v435
      %v437 = vrot.slane %v352, %v436
      %v438 = vlaneseq
      %v439 = vshrl.u32 %v438, 7
      %v440 = vsub.s32 1, %v439
      %v441 = vrot.slane %v352, %v440
      %v442 = vlaneseq
      %v443 = vshrl.u32 %v442, 7
      %v444 = vsub.s32 2, %v443
      %v445 = vrot.slane %v352, %v444
      %v446 = vlaneseq
      %v447 = vshrl.u32 %v446, 7
      %v448 = vsub.s32 3, %v447
      %v449 = vrot.slane %v352, %v448
      %v454 = vmul.f32 %v356, %v437
      %v455 = vmul.f32 %v356, %v441
      %v456 = vmul.f32 %v356, %v445
      %v457 = vmul.f32 %v356, %v449
      %v458 = vmul.f32 %v361, %v437
      %v459 = vmul.f32 %v361, %v441
      %v460 = vmul.f32 %v361, %v445
      %v461 = vmul.f32 %v361, %v449
      %v462 = vmul.f32 %v366, %v437
      %v463 = vmul.f32 %v366, %v441
      %v464 = vmul.f32 %v366, %v445
      %v465 = vmul.f32 %v366, %v449
      %v466 = vmul.f32 %v371, %v437
      %v467 = vmul.f32 %v371, %v441
      %v468 = vmul.f32 %v371, %v445
      %v469 = vmul.f32 %v371, %v449
      %v470 = vmul.f32 %v376, %v437
      %v471 = vmul.f32 %v376, %v441
      %v472 = vmul.f32 %v376, %v445
      %v473 = vmul.f32 %v376, %v449
      %v474 = vmul.f32 %v381, %v437
      %v475 = vmul.f32 %v381, %v441
      %v476 = vmul.f32 %v381, %v445
      %v477 = vmul.f32 %v381, %v449
      %v478 = vmul.f32 %v386, %v437
      %v479 = vmul.f32 %v386, %v441
      %v480 = vmul.f32 %v386, %v445
      %v481 = vmul.f32 %v386, %v449
      %v482 = vmul.f32 %v391, %v437
      %v483 = vmul.f32 %v391, %v441
      %v484 = vmul.f32 %v391, %v445
      %v485 = vmul.f32 %v391, %v449
      %v486 = vmul.f32 %v396, %v437
      %v487 = vmul.f32 %v396, %v441
      %v488 = vmul.f32 %v396, %v445
      %v489 = vmul.f32 %v396, %v449
      %v490 = vmul.f32 %v401, %v437
      %v491 = vmul.f32 %v401, %v441
      %v492 = vmul.f32 %v401, %v445
      %v493 = vmul.f32 %v401, %v449
      %v494 = vmul.f32 %v406, %v437
      %v495 = vmul.f32 %v406, %v441
      %v496 = vmul.f32 %v406, %v445
      %v497 = vmul.f32 %v406, %v449
      %v498 = vmul.f32 %v411, %v437
      %v499 = vmul.f32 %v411, %v441
      %v500 = vmul.f32 %v411, %v445
      %v501 = vmul.f32 %v411, %v449
      %v502 = vmul.f32 %v416, %v437
      %v503 = vmul.f32 %v416, %v441
      %v504 = vmul.f32 %v416, %v445
      %v505 = vmul.f32 %v416, %v449
      %v506 = vmul.f32 %v421, %v437
      %v507 = vmul.f32 %v421, %v441
      %v508 = vmul.f32 %v421, %v445
      %v509 = vmul.f32 %v421, %v449
      %v510 = vmul.f32 %v426, %v437
      %v511 = vmul.f32 %v426, %v441
      %v512 = vmul.f32 %v426, %v445
      %v513 = vmul.f32 %v426, %v449
      %v514 = vmul.f32 %v431, %v437
      %v515 = vmul.f32 %v431, %v441
      %v516 = vmul.f32 %v431, %v445
      %v517 = vmul.f32 %v431, %v449
      %s518 = scalar_lea.vmem %s328, 1
      %v519 = vld [vmem:[%s518] ss:$4 sm:$0xf]
      %520 = vset.pattern.permute.xlu0 1
      %521 = vperm.xlu0 %520, %v336
      %v522 = vpop.permute.xlu0 %521
      %524 = vset.pattern.permute.xlu0 1
      %525 = vperm.xlu0 %524, %v337
      %v526 = vpop.permute.xlu0 %525
      %528 = vset.pattern.permute.xlu0 1
      %529 = vperm.xlu0 %528, %v338
      %v530 = vpop.permute.xlu0 %529
      %532 = vset.pattern.permute.xlu0 1
      %533 = vperm.xlu0 %532, %v339
      %v534 = vpop.permute.xlu0 %533
      %536 = vset.pattern.permute.xlu0 1
      %537 = vperm.xlu0 %536, %v340
      %v538 = vpop.permute.xlu0 %537
      %540 = vset.pattern.permute.xlu0 1
      %541 = vperm.xlu0 %540, %v341
      %v542 = vpop.permute.xlu0 %541
      %544 = vset.pattern.permute.xlu0 1
      %545 = vperm.xlu0 %544, %v342
      %v546 = vpop.permute.xlu0 %545
      %548 = vset.pattern.permute.xlu0 1
      %549 = vperm.xlu0 %548, %v343
      %v550 = vpop.permute.xlu0 %549
      %552 = vset.pattern.permute.xlu0 1
      %553 = vperm.xlu0 %552, %v344
      %v554 = vpop.permute.xlu0 %553
      %556 = vset.pattern.permute.xlu0 1
      %557 = vperm.xlu0 %556, %v345
      %v558 = vpop.permute.xlu0 %557
      %560 = vset.pattern.permute.xlu0 1
      %561 = vperm.xlu0 %560, %v346
      %v562 = vpop.permute.xlu0 %561
      %564 = vset.pattern.permute.xlu0 1
      %565 = vperm.xlu0 %564, %v347
      %v566 = vpop.permute.xlu0 %565
      %568 = vset.pattern.permute.xlu0 1
      %569 = vperm.xlu0 %568, %v348
      %v570 = vpop.permute.xlu0 %569
      %572 = vset.pattern.permute.xlu0 1
      %573 = vperm.xlu0 %572, %v349
      %v574 = vpop.permute.xlu0 %573
      %576 = vset.pattern.permute.xlu0 1
      %577 = vperm.xlu0 %576, %v350
      %v578 = vpop.permute.xlu0 %577
      %580 = vset.pattern.permute.xlu0 1
      %581 = vperm.xlu0 %580, %v351
      %v582 = vpop.permute.xlu0 %581
      %v585 = vlaneseq
      %v586 = vshrl.u32 %v585, 7
      %v587 = vsub.s32 0, %v586
      %v588 = vrot.slane %v519, %v587
      %v589 = vlaneseq
      %v590 = vshrl.u32 %v589, 7
      %v591 = vsub.s32 1, %v590
      %v592 = vrot.slane %v519, %v591
      %v593 = vlaneseq
      %v594 = vshrl.u32 %v593, 7
      %v595 = vsub.s32 2, %v594
      %v596 = vrot.slane %v519, %v595
      %v597 = vlaneseq
      %v598 = vshrl.u32 %v597, 7
      %v599 = vsub.s32 3, %v598
      %v600 = vrot.slane %v519, %v599
      %v605 = vmul.f32 %v522, %v588
      %v606 = vmul.f32 %v522, %v592
      %v607 = vmul.f32 %v522, %v596
      %v608 = vmul.f32 %v522, %v600
      %v609 = vmul.f32 %v526, %v588
      %v610 = vmul.f32 %v526, %v592
      %v611 = vmul.f32 %v526, %v596
      %v612 = vmul.f32 %v526, %v600
      %v613 = vmul.f32 %v530, %v588
      %v614 = vmul.f32 %v530, %v592
      %v615 = vmul.f32 %v530, %v596
      %v616 = vmul.f32 %v530, %v600
      %v617 = vmul.f32 %v534, %v588
      %v618 = vmul.f32 %v534, %v592
      %v619 = vmul.f32 %v534, %v596
      %v620 = vmul.f32 %v534, %v600
      %v621 = vmul.f32 %v538, %v588
      %v622 = vmul.f32 %v538, %v592
      %v623 = vmul.f32 %v538, %v596
      %v624 = vmul.f32 %v538, %v600
      %v625 = vmul.f32 %v542, %v588
      %v626 = vmul.f32 %v542, %v592
      %v627 = vmul.f32 %v542, %v596
      %v628 = vmul.f32 %v542, %v600
      %v629 = vmul.f32 %v546, %v588
      %v630 = vmul.f32 %v546, %v592
      %v631 = vmul.f32 %v546, %v596
      %v632 = vmul.f32 %v546, %v600
      %v633 = vmul.f32 %v550, %v588
      %v634 = vmul.f32 %v550, %v592
      %v635 = vmul.f32 %v550, %v596
      %v636 = vmul.f32 %v550, %v600
      %v637 = vmul.f32 %v554, %v588
      %v638 = vmul.f32 %v554, %v592
      %v639 = vmul.f32 %v554, %v596
      %v640 = vmul.f32 %v554, %v600
      %v641 = vmul.f32 %v558, %v588
      %v642 = vmul.f32 %v558, %v592
      %v643 = vmul.f32 %v558, %v596
      %v644 = vmul.f32 %v558, %v600
      %v645 = vmul.f32 %v562, %v588
      %v646 = vmul.f32 %v562, %v592
      %v647 = vmul.f32 %v562, %v596
      %v648 = vmul.f32 %v562, %v600
      %v649 = vmul.f32 %v566, %v588
      %v650 = vmul.f32 %v566, %v592
      %v651 = vmul.f32 %v566, %v596
      %v652 = vmul.f32 %v566, %v600
      %v653 = vmul.f32 %v570, %v588
      %v654 = vmul.f32 %v570, %v592
      %v655 = vmul.f32 %v570, %v596
      %v656 = vmul.f32 %v570, %v600
      %v657 = vmul.f32 %v574, %v588
      %v658 = vmul.f32 %v574, %v592
      %v659 = vmul.f32 %v574, %v596
      %v660 = vmul.f32 %v574, %v600
      %v661 = vmul.f32 %v578, %v588
      %v662 = vmul.f32 %v578, %v592
      %v663 = vmul.f32 %v578, %v596
      %v664 = vmul.f32 %v578, %v600
      %v665 = vmul.f32 %v582, %v588
      %v666 = vmul.f32 %v582, %v592
      %v667 = vmul.f32 %v582, %v596
      %v668 = vmul.f32 %v582, %v600
      %v669 = vadd.f32 %v454, %v605
      %v670 = vadd.f32 %v455, %v606
      %v671 = vadd.f32 %v456, %v607
      %v672 = vadd.f32 %v457, %v608
      %v673 = vadd.f32 %v458, %v609
      %v674 = vadd.f32 %v459, %v610
      %v675 = vadd.f32 %v460, %v611
      %v676 = vadd.f32 %v461, %v612
      %v677 = vadd.f32 %v462, %v613
      %v678 = vadd.f32 %v463, %v614
      %v679 = vadd.f32 %v464, %v615
      %v680 = vadd.f32 %v465, %v616
      %v681 = vadd.f32 %v466, %v617
      %v682 = vadd.f32 %v467, %v618
      %v683 = vadd.f32 %v468, %v619
      %v684 = vadd.f32 %v469, %v620
      %v685 = vadd.f32 %v470, %v621
      %v686 = vadd.f32 %v471, %v622
      %v687 = vadd.f32 %v472, %v623
      %v688 = vadd.f32 %v473, %v624
      %v689 = vadd.f32 %v474, %v625
      %v690 = vadd.f32 %v475, %v626
      %v691 = vadd.f32 %v476, %v627
      %v692 = vadd.f32 %v477, %v628
      %v693 = vadd.f32 %v478, %v629
      %v694 = vadd.f32 %v479, %v630
      %v695 = vadd.f32 %v480, %v631
      %v696 = vadd.f32 %v481, %v632
      %v697 = vadd.f32 %v482, %v633
      %v698 = vadd.f32 %v483, %v634
      %v699 = vadd.f32 %v484, %v635
      %v700 = vadd.f32 %v485, %v636
      %v701 = vadd.f32 %v486, %v637
      %v702 = vadd.f32 %v487, %v638
      %v703 = vadd.f32 %v488, %v639
      %v704 = vadd.f32 %v489, %v640
      %v705 = vadd.f32 %v490, %v641
      %v706 = vadd.f32 %v491, %v642
      %v707 = vadd.f32 %v492, %v643
      %v708 = vadd.f32 %v493, %v644
      %v709 = vadd.f32 %v494, %v645
      %v710 = vadd.f32 %v495, %v646
      %v711 = vadd.f32 %v496, %v647
      %v712 = vadd.f32 %v497, %v648
      %v713 = vadd.f32 %v498, %v649
      %v714 = vadd.f32 %v499, %v650
      %v715 = vadd.f32 %v500, %v651
      %v716 = vadd.f32 %v501, %v652
      %v717 = vadd.f32 %v502, %v653
      %v718 = vadd.f32 %v503, %v654
      %v719 = vadd.f32 %v504, %v655
      %v720 = vadd.f32 %v505, %v656
      %v721 = vadd.f32 %v506, %v657
      %v722 = vadd.f32 %v507, %v658
      %v723 = vadd.f32 %v508, %v659
      %v724 = vadd.f32 %v509, %v660
      %v725 = vadd.f32 %v510, %v661
      %v726 = vadd.f32 %v511, %v662
      %v727 = vadd.f32 %v512, %v663
      %v728 = vadd.f32 %v513, %v664
      %v729 = vadd.f32 %v514, %v665
      %v730 = vadd.f32 %v515, %v666
      %v731 = vadd.f32 %v516, %v667
      %v732 = vadd.f32 %v517, %v668
      %s733 = scalar_lea.vmem %s328, 2
      %v734 = vld [vmem:[%s733] ss:$4 sm:$0xf]
      %735 = vset.pattern.permute.xlu0 2
      %736 = vperm.xlu0 %735, %v336
      %v737 = vpop.permute.xlu0 %736
      %739 = vset.pattern.permute.xlu0 2
      %740 = vperm.xlu0 %739, %v337
      %v741 = vpop.permute.xlu0 %740
      %743 = vset.pattern.permute.xlu0 2
      %744 = vperm.xlu0 %743, %v338
      %v745 = vpop.permute.xlu0 %744
      %747 = vset.pattern.permute.xlu0 2
      %748 = vperm.xlu0 %747, %v339
      %v749 = vpop.permute.xlu0 %748
      %751 = vset.pattern.permute.xlu0 2
      %752 = vperm.xlu0 %751, %v340
      %v753 = vpop.permute.xlu0 %752
      %755 = vset.pattern.permute.xlu0 2
      %756 = vperm.xlu0 %755, %v341
      %v757 = vpop.permute.xlu0 %756
      %759 = vset.pattern.permute.xlu0 2
      %760 = vperm.xlu0 %759, %v342
      %v761 = vpop.permute.xlu0 %760
      %763 = vset.pattern.permute.xlu0 2
      %764 = vperm.xlu0 %763, %v343
      %v765 = vpop.permute.xlu0 %764
      %767 = vset.pattern.permute.xlu0 2
      %768 = vperm.xlu0 %767, %v344
      %v769 = vpop.permute.xlu0 %768
      %771 = vset.pattern.permute.xlu0 2
      %772 = vperm.xlu0 %771, %v345
      %v773 = vpop.permute.xlu0 %772
      %775 = vset.pattern.permute.xlu0 2
      %776 = vperm.xlu0 %775, %v346
      %v777 = vpop.permute.xlu0 %776
      %779 = vset.pattern.permute.xlu0 2
      %780 = vperm.xlu0 %779, %v347
      %v781 = vpop.permute.xlu0 %780
      %783 = vset.pattern.permute.xlu0 2
      %784 = vperm.xlu0 %783, %v348
      %v785 = vpop.permute.xlu0 %784
      %787 = vset.pattern.permute.xlu0 2
      %788 = vperm.xlu0 %787, %v349
      %v789 = vpop.permute.xlu0 %788
      %791 = vset.pattern.permute.xlu0 2
      %792 = vperm.xlu0 %791, %v350
      %v793 = vpop.permute.xlu0 %792
      %795 = vset.pattern.permute.xlu0 2
      %796 = vperm.xlu0 %795, %v351
      %v797 = vpop.permute.xlu0 %796
      %v800 = vlaneseq
      %v801 = vshrl.u32 %v800, 7
      %v802 = vsub.s32 0, %v801
      %v803 = vrot.slane %v734, %v802
      %v804 = vlaneseq
      %v805 = vshrl.u32 %v804, 7
      %v806 = vsub.s32 1, %v805
      %v807 = vrot.slane %v734, %v806
      %v808 = vlaneseq
      %v809 = vshrl.u32 %v808, 7
      %v810 = vsub.s32 2, %v809
      %v811 = vrot.slane %v734, %v810
      %v812 = vlaneseq
      %v813 = vshrl.u32 %v812, 7
      %v814 = vsub.s32 3, %v813
      %v815 = vrot.slane %v734, %v814
      %v820 = vmul.f32 %v737, %v803
      %v821 = vmul.f32 %v737, %v807
      %v822 = vmul.f32 %v737, %v811
      %v823 = vmul.f32 %v737, %v815
      %v824 = vmul.f32 %v741, %v803
      %v825 = vmul.f32 %v741, %v807
      %v826 = vmul.f32 %v741, %v811
      %v827 = vmul.f32 %v741, %v815
      %v828 = vmul.f32 %v745, %v803
      %v829 = vmul.f32 %v745, %v807
      %v830 = vmul.f32 %v745, %v811
      %v831 = vmul.f32 %v745, %v815
      %v832 = vmul.f32 %v749, %v803
      %v833 = vmul.f32 %v749, %v807
      %v834 = vmul.f32 %v749, %v811
      %v835 = vmul.f32 %v749, %v815
      %v836 = vmul.f32 %v753, %v803
      %v837 = vmul.f32 %v753, %v807
      %v838 = vmul.f32 %v753, %v811
      %v839 = vmul.f32 %v753, %v815
      %v840 = vmul.f32 %v757, %v803
      %v841 = vmul.f32 %v757, %v807
      %v842 = vmul.f32 %v757, %v811
      %v843 = vmul.f32 %v757, %v815
      %v844 = vmul.f32 %v761, %v803
      %v845 = vmul.f32 %v761, %v807
      %v846 = vmul.f32 %v761, %v811
      %v847 = vmul.f32 %v761, %v815
      %v848 = vmul.f32 %v765, %v803
      %v849 = vmul.f32 %v765, %v807
      %v850 = vmul.f32 %v765, %v811
      %v851 = vmul.f32 %v765, %v815
      %v852 = vmul.f32 %v769, %v803
      %v853 = vmul.f32 %v769, %v807
      %v854 = vmul.f32 %v769, %v811
      %v855 = vmul.f32 %v769, %v815
      %v856 = vmul.f32 %v773, %v803
      %v857 = vmul.f32 %v773, %v807
      %v858 = vmul.f32 %v773, %v811
      %v859 = vmul.f32 %v773, %v815
      %v860 = vmul.f32 %v777, %v803
      %v861 = vmul.f32 %v777, %v807
      %v862 = vmul.f32 %v777, %v811
      %v863 = vmul.f32 %v777, %v815
      %v864 = vmul.f32 %v781, %v803
      %v865 = vmul.f32 %v781, %v807
      %v866 = vmul.f32 %v781, %v811
      %v867 = vmul.f32 %v781, %v815
      %v868 = vmul.f32 %v785, %v803
      %v869 = vmul.f32 %v785, %v807
      %v870 = vmul.f32 %v785, %v811
      %v871 = vmul.f32 %v785, %v815
      %v872 = vmul.f32 %v789, %v803
      %v873 = vmul.f32 %v789, %v807
      %v874 = vmul.f32 %v789, %v811
      %v875 = vmul.f32 %v789, %v815
      %v876 = vmul.f32 %v793, %v803
      %v877 = vmul.f32 %v793, %v807
      %v878 = vmul.f32 %v793, %v811
      %v879 = vmul.f32 %v793, %v815
      %v880 = vmul.f32 %v797, %v803
      %v881 = vmul.f32 %v797, %v807
      %v882 = vmul.f32 %v797, %v811
      %v883 = vmul.f32 %v797, %v815
      %v884 = vadd.f32 %v669, %v820
      %v885 = vadd.f32 %v670, %v821
      %v886 = vadd.f32 %v671, %v822
      %v887 = vadd.f32 %v672, %v823
      %v888 = vadd.f32 %v673, %v824
      %v889 = vadd.f32 %v674, %v825
      %v890 = vadd.f32 %v675, %v826
      %v891 = vadd.f32 %v676, %v827
      %v892 = vadd.f32 %v677, %v828
      %v893 = vadd.f32 %v678, %v829
      %v894 = vadd.f32 %v679, %v830
      %v895 = vadd.f32 %v680, %v831
      %v896 = vadd.f32 %v681, %v832
      %v897 = vadd.f32 %v682, %v833
      %v898 = vadd.f32 %v683, %v834
      %v899 = vadd.f32 %v684, %v835
      %v900 = vadd.f32 %v685, %v836
      %v901 = vadd.f32 %v686, %v837
      %v902 = vadd.f32 %v687, %v838
      %v903 = vadd.f32 %v688, %v839
      %v904 = vadd.f32 %v689, %v840
      %v905 = vadd.f32 %v690, %v841
      %v906 = vadd.f32 %v691, %v842
      %v907 = vadd.f32 %v692, %v843
      %v908 = vadd.f32 %v693, %v844
      %v909 = vadd.f32 %v694, %v845
      %v910 = vadd.f32 %v695, %v846
      %v911 = vadd.f32 %v696, %v847
      %v912 = vadd.f32 %v697, %v848
      %v913 = vadd.f32 %v698, %v849
      %v914 = vadd.f32 %v699, %v850
      %v915 = vadd.f32 %v700, %v851
      %v916 = vadd.f32 %v701, %v852
      %v917 = vadd.f32 %v702, %v853
      %v918 = vadd.f32 %v703, %v854
      %v919 = vadd.f32 %v704, %v855
      %v920 = vadd.f32 %v705, %v856
      %v921 = vadd.f32 %v706, %v857
      %v922 = vadd.f32 %v707, %v858
      %v923 = vadd.f32 %v708, %v859
      %v924 = vadd.f32 %v709, %v860
      %v925 = vadd.f32 %v710, %v861
      %v926 = vadd.f32 %v711, %v862
      %v927 = vadd.f32 %v712, %v863
      %v928 = vadd.f32 %v713, %v864
      %v929 = vadd.f32 %v714, %v865
      %v930 = vadd.f32 %v715, %v866
      %v931 = vadd.f32 %v716, %v867
      %v932 = vadd.f32 %v717, %v868
      %v933 = vadd.f32 %v718, %v869
      %v934 = vadd.f32 %v719, %v870
      %v935 = vadd.f32 %v720, %v871
      %v936 = vadd.f32 %v721, %v872
      %v937 = vadd.f32 %v722, %v873
      %v938 = vadd.f32 %v723, %v874
      %v939 = vadd.f32 %v724, %v875
      %v940 = vadd.f32 %v725, %v876
      %v941 = vadd.f32 %v726, %v877
      %v942 = vadd.f32 %v727, %v878
      %v943 = vadd.f32 %v728, %v879
      %v944 = vadd.f32 %v729, %v880
      %v945 = vadd.f32 %v730, %v881
      %v946 = vadd.f32 %v731, %v882
      %v947 = vadd.f32 %v732, %v883
      %v948 = vld [vmem:[%s2] sm:$0xff]
      %v949 = vld [vmem:[%s2 + $0x8] sm:$0xff]
      %v950 = vld [vmem:[%s2 + $0x10] sm:$0xff]
      %v951 = vld [vmem:[%s2 + $0x18] sm:$0xff]
      %v952 = vld [vmem:[%s2 + $0x20] sm:$0xff]
      %v953 = vld [vmem:[%s2 + $0x28] sm:$0xff]
      %v954 = vld [vmem:[%s2 + $0x30] sm:$0xff]
      %v955 = vld [vmem:[%s2 + $0x38] sm:$0xff]
      %v956 = vld [vmem:[%s2 + $0x40] sm:$0xff]
      %v957 = vld [vmem:[%s2 + $0x48] sm:$0xff]
      %v958 = vld [vmem:[%s2 + $0x50] sm:$0xff]
      %v959 = vld [vmem:[%s2 + $0x58] sm:$0xff]
      %v960 = vld [vmem:[%s2 + $0x60] sm:$0xff]
      %v961 = vld [vmem:[%s2 + $0x68] sm:$0xff]
      %v962 = vld [vmem:[%s2 + $0x70] sm:$0xff]
      %v963 = vld [vmem:[%s2 + $0x78] sm:$0xff]
      %965 = vset.pattern.permute.xlu0 0
      %966 = vperm.xlu0 %965, %v948
      %v967 = vpop.permute.xlu0 %966
      %970 = vset.pattern.permute.xlu0 0
      %971 = vperm.xlu0 %970, %v949
      %v972 = vpop.permute.xlu0 %971
      %975 = vset.pattern.permute.xlu0 0
      %976 = vperm.xlu0 %975, %v950
      %v977 = vpop.permute.xlu0 %976
      %980 = vset.pattern.permute.xlu0 0
      %981 = vperm.xlu0 %980, %v951
      %v982 = vpop.permute.xlu0 %981
      %985 = vset.pattern.permute.xlu0 0
      %986 = vperm.xlu0 %985, %v952
      %v987 = vpop.permute.xlu0 %986
      %990 = vset.pattern.permute.xlu0 0
      %991 = vperm.xlu0 %990, %v953
      %v992 = vpop.permute.xlu0 %991
      %995 = vset.pattern.permute.xlu0 0
      %996 = vperm.xlu0 %995, %v954
      %v997 = vpop.permute.xlu0 %996
      %1000 = vset.pattern.permute.xlu0 0
      %1001 = vperm.xlu0 %1000, %v955
      %v1002 = vpop.permute.xlu0 %1001
      %1005 = vset.pattern.permute.xlu0 0
      %1006 = vperm.xlu0 %1005, %v956
      %v1007 = vpop.permute.xlu0 %1006
      %1010 = vset.pattern.permute.xlu0 0
      %1011 = vperm.xlu0 %1010, %v957
      %v1012 = vpop.permute.xlu0 %1011
      %1015 = vset.pattern.permute.xlu0 0
      %1016 = vperm.xlu0 %1015, %v958
      %v1017 = vpop.permute.xlu0 %1016
      %1020 = vset.pattern.permute.xlu0 0
      %1021 = vperm.xlu0 %1020, %v959
      %v1022 = vpop.permute.xlu0 %1021
      %1025 = vset.pattern.permute.xlu0 0
      %1026 = vperm.xlu0 %1025, %v960
      %v1027 = vpop.permute.xlu0 %1026
      %1030 = vset.pattern.permute.xlu0 0
      %1031 = vperm.xlu0 %1030, %v961
      %v1032 = vpop.permute.xlu0 %1031
      %1035 = vset.pattern.permute.xlu0 0
      %1036 = vperm.xlu0 %1035, %v962
      %v1037 = vpop.permute.xlu0 %1036
      %1040 = vset.pattern.permute.xlu0 0
      %1041 = vperm.xlu0 %1040, %v963
      %v1042 = vpop.permute.xlu0 %1041
      %v1044 = vadd.f32 %v884, %v967
      %v1045 = vadd.f32 %v885, %v967
      %v1046 = vadd.f32 %v886, %v967
      %v1047 = vadd.f32 %v887, %v967
      %v1048 = vadd.f32 %v888, %v972
      %v1049 = vadd.f32 %v889, %v972
      %v1050 = vadd.f32 %v890, %v972
      %v1051 = vadd.f32 %v891, %v972
      %v1052 = vadd.f32 %v892, %v977
      %v1053 = vadd.f32 %v893, %v977
      %v1054 = vadd.f32 %v894, %v977
      %v1055 = vadd.f32 %v895, %v977
      %v1056 = vadd.f32 %v896, %v982
      %v1057 = vadd.f32 %v897, %v982
      %v1058 = vadd.f32 %v898, %v982
      %v1059 = vadd.f32 %v899, %v982
      %v1060 = vadd.f32 %v900, %v987
      %v1061 = vadd.f32 %v901, %v987
      %v1062 = vadd.f32 %v902, %v987
      %v1063 = vadd.f32 %v903, %v987
      %v1064 = vadd.f32 %v904, %v992
      %v1065 = vadd.f32 %v905, %v992
      %v1066 = vadd.f32 %v906, %v992
      %v1067 = vadd.f32 %v907, %v992
      %v1068 = vadd.f32 %v908, %v997
      %v1069 = vadd.f32 %v909, %v997
      %v1070 = vadd.f32 %v910, %v997
      %v1071 = vadd.f32 %v911, %v997
      %v1072 = vadd.f32 %v912, %v1002
      %v1073 = vadd.f32 %v913, %v1002
      %v1074 = vadd.f32 %v914, %v1002
      %v1075 = vadd.f32 %v915, %v1002
      %v1076 = vadd.f32 %v916, %v1007
      %v1077 = vadd.f32 %v917, %v1007
      %v1078 = vadd.f32 %v918, %v1007
      %v1079 = vadd.f32 %v919, %v1007
      %v1080 = vadd.f32 %v920, %v1012
      %v1081 = vadd.f32 %v921, %v1012
      %v1082 = vadd.f32 %v922, %v1012
      %v1083 = vadd.f32 %v923, %v1012
      %v1084 = vadd.f32 %v924, %v1017
      %v1085 = vadd.f32 %v925, %v1017
      %v1086 = vadd.f32 %v926, %v1017
      %v1087 = vadd.f32 %v927, %v1017
      %v1088 = vadd.f32 %v928, %v1022
      %v1089 = vadd.f32 %v929, %v1022
      %v1090 = vadd.f32 %v930, %v1022
      %v1091 = vadd.f32 %v931, %v1022
      %v1092 = vadd.f32 %v932, %v1027
      %v1093 = vadd.f32 %v933, %v1027
      %v1094 = vadd.f32 %v934, %v1027
      %v1095 = vadd.f32 %v935, %v1027
      %v1096 = vadd.f32 %v936, %v1032
      %v1097 = vadd.f32 %v937, %v1032
      %v1098 = vadd.f32 %v938, %v1032
      %v1099 = vadd.f32 %v939, %v1032
      %v1100 = vadd.f32 %v940, %v1037
      %v1101 = vadd.f32 %v941, %v1037
      %v1102 = vadd.f32 %v942, %v1037
      %v1103 = vadd.f32 %v943, %v1037
      %v1104 = vadd.f32 %v944, %v1042
      %v1105 = vadd.f32 %v945, %v1042
      %v1106 = vadd.f32 %v946, %v1042
      %v1107 = vadd.f32 %v947, %v1042
      %v1108 = vtanh.pop %v1044
      %v1109 = vtanh.pop %v1045
      %v1110 = vtanh.pop %v1046
      %v1111 = vtanh.pop %v1047
      %v1112 = vtanh.pop %v1048
      %v1113 = vtanh.pop %v1049
      %v1114 = vtanh.pop %v1050
      %v1115 = vtanh.pop %v1051
      %v1116 = vtanh.pop %v1052
      %v1117 = vtanh.pop %v1053
      %v1118 = vtanh.pop %v1054
      %v1119 = vtanh.pop %v1055
      %v1120 = vtanh.pop %v1056
      %v1121 = vtanh.pop %v1057
      %v1122 = vtanh.pop %v1058
      %v1123 = vtanh.pop %v1059
      %v1124 = vtanh.pop %v1060
      %v1125 = vtanh.pop %v1061
      %v1126 = vtanh.pop %v1062
      %v1127 = vtanh.pop %v1063
      %v1128 = vtanh.pop %v1064
      %v1129 = vtanh.pop %v1065
      %v1130 = vtanh.pop %v1066
      %v1131 = vtanh.pop %v1067
      %v1132 = vtanh.pop %v1068
      %v1133 = vtanh.pop %v1069
      %v1134 = vtanh.pop %v1070
      %v1135 = vtanh.pop %v1071
      %v1136 = vtanh.pop %v1072
      %v1137 = vtanh.pop %v1073
      %v1138 = vtanh.pop %v1074
      %v1139 = vtanh.pop %v1075
      %v1140 = vtanh.pop %v1076
      %v1141 = vtanh.pop %v1077
      %v1142 = vtanh.pop %v1078
      %v1143 = vtanh.pop %v1079
      %v1144 = vtanh.pop %v1080
      %v1145 = vtanh.pop %v1081
      %v1146 = vtanh.pop %v1082
      %v1147 = vtanh.pop %v1083
      %v1148 = vtanh.pop %v1084
      %v1149 = vtanh.pop %v1085
      %v1150 = vtanh.pop %v1086
      %v1151 = vtanh.pop %v1087
      %v1152 = vtanh.pop %v1088
      %v1153 = vtanh.pop %v1089
      %v1154 = vtanh.pop %v1090
      %v1155 = vtanh.pop %v1091
      %v1156 = vtanh.pop %v1092
      %v1157 = vtanh.pop %v1093
      %v1158 = vtanh.pop %v1094
      %v1159 = vtanh.pop %v1095
      %v1160 = vtanh.pop %v1096
      %v1161 = vtanh.pop %v1097
      %v1162 = vtanh.pop %v1098
      %v1163 = vtanh.pop %v1099
      %v1164 = vtanh.pop %v1100
      %v1165 = vtanh.pop %v1101
      %v1166 = vtanh.pop %v1102
      %v1167 = vtanh.pop %v1103
      %v1168 = vtanh.pop %v1104
      %v1169 = vtanh.pop %v1105
      %v1170 = vtanh.pop %v1106
      %v1171 = vtanh.pop %v1107
      %v1172 = vld [vmem:[%s3] sm:$0xff]
      %v1173 = vld [vmem:[%s3 + $0x8] sm:$0xff]
      %v1174 = vld [vmem:[%s3 + $0x10] sm:$0xff]
      %v1175 = vld [vmem:[%s3 + $0x18] sm:$0xff]
      %v1176 = vld [vmem:[%s3 + $0x20] sm:$0xff]
      %v1177 = vld [vmem:[%s3 + $0x28] sm:$0xff]
      %v1178 = vld [vmem:[%s3 + $0x30] sm:$0xff]
      %v1179 = vld [vmem:[%s3 + $0x38] sm:$0xff]
      %v1180 = vld [vmem:[%s3 + $0x40] sm:$0xff]
      %v1181 = vld [vmem:[%s3 + $0x48] sm:$0xff]
      %v1182 = vld [vmem:[%s3 + $0x50] sm:$0xff]
      %v1183 = vld [vmem:[%s3 + $0x58] sm:$0xff]
      %v1184 = vld [vmem:[%s3 + $0x60] sm:$0xff]
      %v1185 = vld [vmem:[%s3 + $0x68] sm:$0xff]
      %v1186 = vld [vmem:[%s3 + $0x70] sm:$0xff]
      %v1187 = vld [vmem:[%s3 + $0x78] sm:$0xff]
      %v1188 = vld [vmem:[%s4] sm:$0xff]
      %v1189 = vld [vmem:[%s4 + $0x8] sm:$0xff]
      %v1190 = vld [vmem:[%s4 + $0x10] sm:$0xff]
      %v1191 = vld [vmem:[%s4 + $0x18] sm:$0xff]
      %v1192 = vld [vmem:[%s4 + $0x20] sm:$0xff]
      %v1193 = vld [vmem:[%s4 + $0x28] sm:$0xff]
      %v1194 = vld [vmem:[%s4 + $0x30] sm:$0xff]
      %v1195 = vld [vmem:[%s4 + $0x38] sm:$0xff]
      %v1196 = vld [vmem:[%s4 + $0x40] sm:$0xff]
      %v1197 = vld [vmem:[%s4 + $0x48] sm:$0xff]
      %v1198 = vld [vmem:[%s4 + $0x50] sm:$0xff]
      %v1199 = vld [vmem:[%s4 + $0x58] sm:$0xff]
      %v1200 = vld [vmem:[%s4 + $0x60] sm:$0xff]
      %v1201 = vld [vmem:[%s4 + $0x68] sm:$0xff]
      %v1202 = vld [vmem:[%s4 + $0x70] sm:$0xff]
      %v1203 = vld [vmem:[%s4 + $0x78] sm:$0xff]
      %1205 = vset.pattern.permute.xlu0 0
      %1206 = vperm.xlu0 %1205, %v1188
      %v1207 = vpop.permute.xlu0 %1206
      %1210 = vset.pattern.permute.xlu0 0
      %1211 = vperm.xlu0 %1210, %v1189
      %v1212 = vpop.permute.xlu0 %1211
      %1215 = vset.pattern.permute.xlu0 0
      %1216 = vperm.xlu0 %1215, %v1190
      %v1217 = vpop.permute.xlu0 %1216
      %1220 = vset.pattern.permute.xlu0 0
      %1221 = vperm.xlu0 %1220, %v1191
      %v1222 = vpop.permute.xlu0 %1221
      %1225 = vset.pattern.permute.xlu0 0
      %1226 = vperm.xlu0 %1225, %v1192
      %v1227 = vpop.permute.xlu0 %1226
      %1230 = vset.pattern.permute.xlu0 0
      %1231 = vperm.xlu0 %1230, %v1193
      %v1232 = vpop.permute.xlu0 %1231
      %1235 = vset.pattern.permute.xlu0 0
      %1236 = vperm.xlu0 %1235, %v1194
      %v1237 = vpop.permute.xlu0 %1236
      %1240 = vset.pattern.permute.xlu0 0
      %1241 = vperm.xlu0 %1240, %v1195
      %v1242 = vpop.permute.xlu0 %1241
      %1245 = vset.pattern.permute.xlu0 0
      %1246 = vperm.xlu0 %1245, %v1196
      %v1247 = vpop.permute.xlu0 %1246
      %1250 = vset.pattern.permute.xlu0 0
      %1251 = vperm.xlu0 %1250, %v1197
      %v1252 = vpop.permute.xlu0 %1251
      %1255 = vset.pattern.permute.xlu0 0
      %1256 = vperm.xlu0 %1255, %v1198
      %v1257 = vpop.permute.xlu0 %1256
      %1260 = vset.pattern.permute.xlu0 0
      %1261 = vperm.xlu0 %1260, %v1199
      %v1262 = vpop.permute.xlu0 %1261
      %1265 = vset.pattern.permute.xlu0 0
      %1266 = vperm.xlu0 %1265, %v1200
      %v1267 = vpop.permute.xlu0 %1266
      %1270 = vset.pattern.permute.xlu0 0
      %1271 = vperm.xlu0 %1270, %v1201
      %v1272 = vpop.permute.xlu0 %1271
      %1275 = vset.pattern.permute.xlu0 0
      %1276 = vperm.xlu0 %1275, %v1202
      %v1277 = vpop.permute.xlu0 %1276
      %1280 = vset.pattern.permute.xlu0 0
      %1281 = vperm.xlu0 %1280, %v1203
      %v1282 = vpop.permute.xlu0 %1281
      %1284 = vmatprep.subr.mxu0 %v1109
      %1285 = vmatpush1.msra.mxu0 %v1108
      %1286 = vmatprep.subr.mxu0 %v1113
      %1287 = vmatpush1.msra.mxu0 %v1112
      %1288 = vmatprep.subr.mxu0 %v1117
      %1289 = vmatpush1.msra.mxu0 %v1116
      %1290 = vmatprep.subr.mxu0 %v1121
      %1291 = vmatpush1.msra.mxu0 %v1120
      %1292 = vmatprep.subr.mxu0 %v1125
      %1293 = vmatpush1.msra.mxu0 %v1124
      %1294 = vmatprep.subr.mxu0 %v1129
      %1295 = vmatpush1.msra.mxu0 %v1128
      %1296 = vmatprep.subr.mxu0 %v1133
      %1297 = vmatpush1.msra.mxu0 %v1132
      %1298 = vmatprep.subr.mxu0 %v1137
      %1299 = vmatpush1.msra.mxu0 %v1136
      %1300 = vmatprep.subr.mxu0 %v1141
      %1301 = vmatpush1.msra.mxu0 %v1140
      %1302 = vmatprep.subr.mxu0 %v1145
      %1303 = vmatpush1.msra.mxu0 %v1144
      %1304 = vmatprep.subr.mxu0 %v1149
      %1305 = vmatpush1.msra.mxu0 %v1148
      %1306 = vmatprep.subr.mxu0 %v1153
      %1307 = vmatpush1.msra.mxu0 %v1152
      %1308 = vmatprep.subr.mxu0 %v1157
      %1309 = vmatpush1.msra.mxu0 %v1156
      %1310 = vmatprep.subr.mxu0 %v1161
      %1311 = vmatpush1.msra.mxu0 %v1160
      %1312 = vmatprep.subr.mxu0 %v1165
      %1313 = vmatpush1.msra.mxu0 %v1164
      %1314 = vmatprep.subr.mxu0 %v1169
      %1315 = vmatpush1.msra.mxu0 %v1168
      %1316 = vmatprep.subr.mxu0 0.0
      %1317 = vmatpush1.msra.mxu0 0.0
      %1318 = vmatprep.subr.mxu0 0.0
      %1319 = vmatpush1.msra.mxu0 0.0
      %1320 = vmatprep.subr.mxu0 0.0
      %1321 = vmatpush1.msra.mxu0 0.0
      %1322 = vmatprep.subr.mxu0 0.0
      %1323 = vmatpush1.msra.mxu0 0.0
      %1324 = vmatprep.subr.mxu0 0.0
      %1325 = vmatpush1.msra.mxu0 0.0
      %1326 = vmatprep.subr.mxu0 0.0
      %1327 = vmatpush1.msra.mxu0 0.0
      %1328 = vmatprep.subr.mxu0 0.0
      %1329 = vmatpush1.msra.mxu0 0.0
      %1330 = vmatprep.subr.mxu0 0.0
      %1331 = vmatpush1.msra.mxu0 0.0
      %1332 = vmatprep.subr.mxu0 0.0
      %1333 = vmatpush1.msra.mxu0 0.0
      %1334 = vmatprep.subr.mxu0 0.0
      %1335 = vmatpush1.msra.mxu0 0.0
      %1336 = vmatprep.subr.mxu0 0.0
      %1337 = vmatpush1.msra.mxu0 0.0
      %1338 = vmatprep.subr.mxu0 0.0
      %1339 = vmatpush1.msra.mxu0 0.0
      %1340 = vmatprep.subr.mxu0 0.0
      %1341 = vmatpush1.msra.mxu0 0.0
      %1342 = vmatprep.subr.mxu0 0.0
      %1343 = vmatpush1.msra.mxu0 0.0
      %1344 = vmatprep.subr.mxu0 0.0
      %1345 = vmatpush1.msra.mxu0 0.0
      %1346 = vmatprep.subr.mxu0 0.0
      %1347 = vmatpush1.msra.mxu0 0.0
      %1348 = vmatprep.mubr.f32.mxu0 0.0
      %1349 = vmatmul.mubr.f32.gmra.mrb[0].mxu0 %v1172
      %v1350 = vpop.f32.mrb[0].mxu0
      %v1351 = vadd.f32 %v1207, %v1350
      %v1352 = vpop.f32.mrb[0].mxu0
      %v1353 = vadd.f32 %v1207, %v1352
      %1354 = vmatprep.mubr.f32.mxu0 0.0
      %1355 = vmatmul.mubr.f32.gmra.mrb[0].mxu0 %v1173
      %v1356 = vpop.f32.mrb[0].mxu0
      %v1357 = vadd.f32 %v1212, %v1356
      %v1358 = vpop.f32.mrb[0].mxu0
      %v1359 = vadd.f32 %v1212, %v1358
      %1360 = vmatprep.mubr.f32.mxu0 0.0
      %1361 = vmatmul.mubr.f32.gmra.mrb[0].mxu0 %v1174
      %v1362 = vpop.f32.mrb[0].mxu0
      %v1363 = vadd.f32 %v1217, %v1362
      %v1364 = vpop.f32.mrb[0].mxu0
      %v1365 = vadd.f32 %v1217, %v1364
      %1366 = vmatprep.mubr.f32.mxu0 0.0
      %1367 = vmatmul.mubr.f32.gmra.mrb[0].mxu0 %v1175
      %v1368 = vpop.f32.mrb[0].mxu0
      %v1369 = vadd.f32 %v1222, %v1368
      %v1370 = vpop.f32.mrb[0].mxu0
      %v1371 = vadd.f32 %v1222, %v1370
      %1372 = vmatprep.mubr.f32.mxu0 0.0
      %1373 = vmatmul.mubr.f32.gmra.mrb[0].mxu0 %v1176
      %v1374 = vpop.f32.mrb[0].mxu0
      %v1375 = vadd.f32 %v1227, %v1374
      %v1376 = vpop.f32.mrb[0].mxu0
      %v1377 = vadd.f32 %v1227, %v1376
      %1378 = vmatprep.mubr.f32.mxu0 0.0
      %1379 = vmatmul.mubr.f32.gmra.mrb[0].mxu0 %v1177
      %v1380 = vpop.f32.mrb[0].mxu0
      %v1381 = vadd.f32 %v1232, %v1380
      %v1382 = vpop.f32.mrb[0].mxu0
      %v1383 = vadd.f32 %v1232, %v1382
      %1384 = vmatprep.mubr.f32.mxu0 0.0
      %1385 = vmatmul.mubr.f32.gmra.mrb[0].mxu0 %v1178
      %v1386 = vpop.f32.mrb[0].mxu0
      %v1387 = vadd.f32 %v1237, %v1386
      %v1388 = vpop.f32.mrb[0].mxu0
      %v1389 = vadd.f32 %v1237, %v1388
      %1390 = vmatprep.mubr.f32.mxu0 0.0
      %1391 = vmatmul.mubr.f32.gmra.mrb[0].mxu0 %v1179
      %v1392 = vpop.f32.mrb[0].mxu0
      %v1393 = vadd.f32 %v1242, %v1392
      %v1394 = vpop.f32.mrb[0].mxu0
      %v1395 = vadd.f32 %v1242, %v1394
      %1396 = vmatprep.mubr.f32.mxu0 0.0
      %1397 = vmatmul.mubr.f32.gmra.mrb[0].mxu0 %v1180
      %v1398 = vpop.f32.mrb[0].mxu0
      %v1399 = vadd.f32 %v1247, %v1398
      %v1400 = vpop.f32.mrb[0].mxu0
      %v1401 = vadd.f32 %v1247, %v1400
      %1402 = vmatprep.mubr.f32.mxu0 0.0
      %1403 = vmatmul.mubr.f32.gmra.mrb[0].mxu0 %v1181
      %v1404 = vpop.f32.mrb[0].mxu0
      %v1405 = vadd.f32 %v1252, %v1404
      %v1406 = vpop.f32.mrb[0].mxu0
      %v1407 = vadd.f32 %v1252, %v1406
      %1408 = vmatprep.mubr.f32.mxu0 0.0
      %1409 = vmatmul.mubr.f32.gmra.mrb[0].mxu0 %v1182
      %v1410 = vpop.f32.mrb[0].mxu0
      %v1411 = vadd.f32 %v1257, %v1410
      %v1412 = vpop.f32.mrb[0].mxu0
      %v1413 = vadd.f32 %v1257, %v1412
      %1414 = vmatprep.mubr.f32.mxu0 0.0
      %1415 = vmatmul.mubr.f32.gmra.mrb[0].mxu0 %v1183
      %v1416 = vpop.f32.mrb[0].mxu0
      %v1417 = vadd.f32 %v1262, %v1416
      %v1418 = vpop.f32.mrb[0].mxu0
      %v1419 = vadd.f32 %v1262, %v1418
      %1420 = vmatprep.mubr.f32.mxu0 0.0
      %1421 = vmatmul.mubr.f32.gmra.mrb[0].mxu0 %v1184
      %v1422 = vpop.f32.mrb[0].mxu0
      %v1423 = vadd.f32 %v1267, %v1422
      %v1424 = vpop.f32.mrb[0].mxu0
      %v1425 = vadd.f32 %v1267, %v1424
      %1426 = vmatprep.mubr.f32.mxu0 0.0
      %1427 = vmatmul.mubr.f32.gmra.mrb[0].mxu0 %v1185
      %v1428 = vpop.f32.mrb[0].mxu0
      %v1429 = vadd.f32 %v1272, %v1428
      %v1430 = vpop.f32.mrb[0].mxu0
      %v1431 = vadd.f32 %v1272, %v1430
      %1432 = vmatprep.mubr.f32.mxu0 0.0
      %1433 = vmatmul.mubr.f32.gmra.mrb[0].mxu0 %v1186
      %v1434 = vpop.f32.mrb[0].mxu0
      %v1435 = vadd.f32 %v1277, %v1434
      %v1436 = vpop.f32.mrb[0].mxu0
      %v1437 = vadd.f32 %v1277, %v1436
      %1438 = vmatprep.mubr.f32.mxu0 0.0
      %1439 = vmatmul.mubr.f32.gmra.mrb[0].mxu0 %v1187
      %v1440 = vpop.f32.mrb[0].mxu0
      %v1441 = vadd.f32 %v1282, %v1440
      %v1442 = vpop.f32.mrb[0].mxu0
      %v1443 = vadd.f32 %v1282, %v1442
      %1444 = vdwg.mxu0
      %1445 = vmatprep.subr.mxu0 %v1111
      %1446 = vmatpush1.msra.mxu0 %v1110
      %1447 = vmatprep.subr.mxu0 %v1115
      %1448 = vmatpush1.msra.mxu0 %v1114
      %1449 = vmatprep.subr.mxu0 %v1119
      %1450 = vmatpush1.msra.mxu0 %v1118
      %1451 = vmatprep.subr.mxu0 %v1123
      %1452 = vmatpush1.msra.mxu0 %v1122
      %1453 = vmatprep.subr.mxu0 %v1127
      %1454 = vmatpush1.msra.mxu0 %v1126
      %1455 = vmatprep.subr.mxu0 %v1131
      %1456 = vmatpush1.msra.mxu0 %v1130
      %1457 = vmatprep.subr.mxu0 %v1135
      %1458 = vmatpush1.msra.mxu0 %v1134
      %1459 = vmatprep.subr.mxu0 %v1139
      %1460 = vmatpush1.msra.mxu0 %v1138
      %1461 = vmatprep.subr.mxu0 %v1143
      %1462 = vmatpush1.msra.mxu0 %v1142
      %1463 = vmatprep.subr.mxu0 %v1147
      %1464 = vmatpush1.msra.mxu0 %v1146
      %1465 = vmatprep.subr.mxu0 %v1151
      %1466 = vmatpush1.msra.mxu0 %v1150
      %1467 = vmatprep.subr.mxu0 %v1155
      %1468 = vmatpush1.msra.mxu0 %v1154
      %1469 = vmatprep.subr.mxu0 %v1159
      %1470 = vmatpush1.msra.mxu0 %v1158
      %1471 = vmatprep.subr.mxu0 %v1163
      %1472 = vmatpush1.msra.mxu0 %v1162
      %1473 = vmatprep.subr.mxu0 %v1167
      %1474 = vmatpush1.msra.mxu0 %v1166
      %1475 = vmatprep.subr.mxu0 %v1171
      %1476 = vmatpush1.msra.mxu0 %v1170
      %1477 = vmatprep.subr.mxu0 0.0
      %1478 = vmatpush1.msra.mxu0 0.0
      %1479 = vmatprep.subr.mxu0 0.0
      %1480 = vmatpush1.msra.mxu0 0.0
      %1481 = vmatprep.subr.mxu0 0.0
      %1482 = vmatpush1.msra.mxu0 0.0
      %1483 = vmatprep.subr.mxu0 0.0
      %1484 = vmatpush1.msra.mxu0 0.0
      %1485 = vmatprep.subr.mxu0 0.0
      %1486 = vmatpush1.msra.mxu0 0.0
      %1487 = vmatprep.subr.mxu0 0.0
      %1488 = vmatpush1.msra.mxu0 0.0
      %1489 = vmatprep.subr.mxu0 0.0
      %1490 = vmatpush1.msra.mxu0 0.0
      %1491 = vmatprep.subr.mxu0 0.0
      %1492 = vmatpush1.msra.mxu0 0.0
      %1493 = vmatprep.subr.mxu0 0.0
      %1494 = vmatpush1.msra.mxu0 0.0
      %1495 = vmatprep.subr.mxu0 0.0
      %1496 = vmatpush1.msra.mxu0 0.0
      %1497 = vmatprep.subr.mxu0 0.0
      %1498 = vmatpush1.msra.mxu0 0.0
      %1499 = vmatprep.subr.mxu0 0.0
      %1500 = vmatpush1.msra.mxu0 0.0
      %1501 = vmatprep.subr.mxu0 0.0
      %1502 = vmatpush1.msra.mxu0 0.0
      %1503 = vmatprep.subr.mxu0 0.0
      %1504 = vmatpush1.msra.mxu0 0.0
      %1505 = vmatprep.subr.mxu0 0.0
      %1506 = vmatpush1.msra.mxu0 0.0
      %1507 = vmatprep.subr.mxu0 0.0
      %1508 = vmatpush1.msra.mxu0 0.0
      %1509 = vmatprep.mubr.f32.mxu0 0.0
      %1510 = vmatmul.mubr.f32.gmra.mrb[0].mxu0 %v1172
      %v1511 = vpop.f32.mrb[0].mxu0
      %v1512 = vadd.f32 %v1207, %v1511
      %v1513 = vpop.f32.mrb[0].mxu0
      %v1514 = vadd.f32 %v1207, %v1513
      %1515 = vmatprep.mubr.f32.mxu0 0.0
      %1516 = vmatmul.mubr.f32.gmra.mrb[0].mxu0 %v1173
      %v1517 = vpop.f32.mrb[0].mxu0
      %v1518 = vadd.f32 %v1212, %v1517
      %v1519 = vpop.f32.mrb[0].mxu0
      %v1520 = vadd.f32 %v1212, %v1519
      %1521 = vmatprep.mubr.f32.mxu0 0.0
      %1522 = vmatmul.mubr.f32.gmra.mrb[0].mxu0 %v1174
      %v1523 = vpop.f32.mrb[0].mxu0
      %v1524 = vadd.f32 %v1217, %v1523
      %v1525 = vpop.f32.mrb[0].mxu0
      %v1526 = vadd.f32 %v1217, %v1525
      %1527 = vmatprep.mubr.f32.mxu0 0.0
      %1528 = vmatmul.mubr.f32.gmra.mrb[0].mxu0 %v1175
      %v1529 = vpop.f32.mrb[0].mxu0
      %v1530 = vadd.f32 %v1222, %v1529
      %v1531 = vpop.f32.mrb[0].mxu0
      %v1532 = vadd.f32 %v1222, %v1531
      %1533 = vmatprep.mubr.f32.mxu0 0.0
      %1534 = vmatmul.mubr.f32.gmra.mrb[0].mxu0 %v1176
      %v1535 = vpop.f32.mrb[0].mxu0
      %v1536 = vadd.f32 %v1227, %v1535
      %v1537 = vpop.f32.mrb[0].mxu0
      %v1538 = vadd.f32 %v1227, %v1537
      %1539 = vmatprep.mubr.f32.mxu0 0.0
      %1540 = vmatmul.mubr.f32.gmra.mrb[0].mxu0 %v1177
      %v1541 = vpop.f32.mrb[0].mxu0
      %v1542 = vadd.f32 %v1232, %v1541
      %v1543 = vpop.f32.mrb[0].mxu0
      %v1544 = vadd.f32 %v1232, %v1543
      %1545 = vmatprep.mubr.f32.mxu0 0.0
      %1546 = vmatmul.mubr.f32.gmra.mrb[0].mxu0 %v1178
      %v1547 = vpop.f32.mrb[0].mxu0
      %v1548 = vadd.f32 %v1237, %v1547
      %v1549 = vpop.f32.mrb[0].mxu0
      %v1550 = vadd.f32 %v1237, %v1549
      %1551 = vmatprep.mubr.f32.mxu0 0.0
      %1552 = vmatmul.mubr.f32.gmra.mrb[0].mxu0 %v1179
      %v1553 = vpop.f32.mrb[0].mxu0
      %v1554 = vadd.f32 %v1242, %v1553
      %v1555 = vpop.f32.mrb[0].mxu0
      %v1556 = vadd.f32 %v1242, %v1555
      %1557 = vmatprep.mubr.f32.mxu0 0.0
      %1558 = vmatmul.mubr.f32.gmra.mrb[0].mxu0 %v1180
      %v1559 = vpop.f32.mrb[0].mxu0
      %v1560 = vadd.f32 %v1247, %v1559
      %v1561 = vpop.f32.mrb[0].mxu0
      %v1562 = vadd.f32 %v1247, %v1561
      %1563 = vmatprep.mubr.f32.mxu0 0.0
      %1564 = vmatmul.mubr.f32.gmra.mrb[0].mxu0 %v1181
      %v1565 = vpop.f32.mrb[0].mxu0
      %v1566 = vadd.f32 %v1252, %v1565
      %v1567 = vpop.f32.mrb[0].mxu0
      %v1568 = vadd.f32 %v1252, %v1567
      %1569 = vmatprep.mubr.f32.mxu0 0.0
      %1570 = vmatmul.mubr.f32.gmra.mrb[0].mxu0 %v1182
      %v1571 = vpop.f32.mrb[0].mxu0
      %v1572 = vadd.f32 %v1257, %v1571
      %v1573 = vpop.f32.mrb[0].mxu0
      %v1574 = vadd.f32 %v1257, %v1573
      %1575 = vmatprep.mubr.f32.mxu0 0.0
      %1576 = vmatmul.mubr.f32.gmra.mrb[0].mxu0 %v1183
      %v1577 = vpop.f32.mrb[0].mxu0
      %v1578 = vadd.f32 %v1262, %v1577
      %v1579 = vpop.f32.mrb[0].mxu0
      %v1580 = vadd.f32 %v1262, %v1579
      %1581 = vmatprep.mubr.f32.mxu0 0.0
      %1582 = vmatmul.mubr.f32.gmra.mrb[0].mxu0 %v1184
      %v1583 = vpop.f32.mrb[0].mxu0
      %v1584 = vadd.f32 %v1267, %v1583
      %v1585 = vpop.f32.mrb[0].mxu0
      %v1586 = vadd.f32 %v1267, %v1585
      %1587 = vmatprep.mubr.f32.mxu0 0.0
      %1588 = vmatmul.mubr.f32.gmra.mrb[0].mxu0 %v1185
      %v1589 = vpop.f32.mrb[0].mxu0
      %v1590 = vadd.f32 %v1272, %v1589
      %v1591 = vpop.f32.mrb[0].mxu0
      %v1592 = vadd.f32 %v1272, %v1591
      %1593 = vmatprep.mubr.f32.mxu0 0.0
      %1594 = vmatmul.mubr.f32.gmra.mrb[0].mxu0 %v1186
      %v1595 = vpop.f32.mrb[0].mxu0
      %v1596 = vadd.f32 %v1277, %v1595
      %v1597 = vpop.f32.mrb[0].mxu0
      %v1598 = vadd.f32 %v1277, %v1597
      %1599 = vmatprep.mubr.f32.mxu0 0.0
      %1600 = vmatmul.mubr.f32.gmra.mrb[0].mxu0 %v1187
      %v1601 = vpop.f32.mrb[0].mxu0
      %v1602 = vadd.f32 %v1282, %v1601
      %v1603 = vpop.f32.mrb[0].mxu0
      %v1604 = vadd.f32 %v1282, %v1603
      %1605 = vdwg.mxu0
      %v1606 = vtanh.pop %v1351
      %v1607 = vtanh.pop %v1353
      %v1608 = vtanh.pop %v1512
      %v1609 = vtanh.pop %v1514
      %v1610 = vtanh.pop %v1357
      %v1611 = vtanh.pop %v1359
      %v1612 = vtanh.pop %v1518
      %v1613 = vtanh.pop %v1520
      %v1614 = vtanh.pop %v1363
      %v1615 = vtanh.pop %v1365
      %v1616 = vtanh.pop %v1524
      %v1617 = vtanh.pop %v1526
      %v1618 = vtanh.pop %v1369
      %v1619 = vtanh.pop %v1371
      %v1620 = vtanh.pop %v1530
      %v1621 = vtanh.pop %v1532
      %v1622 = vtanh.pop %v1375
      %v1623 = vtanh.pop %v1377
      %v1624 = vtanh.pop %v1536
      %v1625 = vtanh.pop %v1538
      %v1626 = vtanh.pop %v1381
      %v1627 = vtanh.pop %v1383
      %v1628 = vtanh.pop %v1542
      %v1629 = vtanh.pop %v1544
      %v1630 = vtanh.pop %v1387
      %v1631 = vtanh.pop %v1389
      %v1632 = vtanh.pop %v1548
      %v1633 = vtanh.pop %v1550
      %v1634 = vtanh.pop %v1393
      %v1635 = vtanh.pop %v1395
      %v1636 = vtanh.pop %v1554
      %v1637 = vtanh.pop %v1556
      %v1638 = vtanh.pop %v1399
      %v1639 = vtanh.pop %v1401
      %v1640 = vtanh.pop %v1560
      %v1641 = vtanh.pop %v1562
      %v1642 = vtanh.pop %v1405
      %v1643 = vtanh.pop %v1407
      %v1644 = vtanh.pop %v1566
      %v1645 = vtanh.pop %v1568
      %v1646 = vtanh.pop %v1411
      %v1647 = vtanh.pop %v1413
      %v1648 = vtanh.pop %v1572
      %v1649 = vtanh.pop %v1574
      %v1650 = vtanh.pop %v1417
      %v1651 = vtanh.pop %v1419
      %v1652 = vtanh.pop %v1578
      %v1653 = vtanh.pop %v1580
      %v1654 = vtanh.pop %v1423
      %v1655 = vtanh.pop %v1425
      %v1656 = vtanh.pop %v1584
      %v1657 = vtanh.pop %v1586
      %v1658 = vtanh.pop %v1429
      %v1659 = vtanh.pop %v1431
      %v1660 = vtanh.pop %v1590
      %v1661 = vtanh.pop %v1592
      %v1662 = vtanh.pop %v1435
      %v1663 = vtanh.pop %v1437
      %v1664 = vtanh.pop %v1596
      %v1665 = vtanh.pop %v1598
      %v1666 = vtanh.pop %v1441
      %v1667 = vtanh.pop %v1443
      %v1668 = vtanh.pop %v1602
      %v1669 = vtanh.pop %v1604
      %v1670 = vld [vmem:[%s5] sm:$0xff]
      %v1671 = vld [vmem:[%s5 + $0x8] sm:$0xff]
      %v1672 = vld [vmem:[%s5 + $0x10] sm:$0xff]
      %v1673 = vld [vmem:[%s5 + $0x18] sm:$0xff]
      %v1674 = vld [vmem:[%s5 + $0x20] sm:$0xff]
      %v1675 = vld [vmem:[%s5 + $0x28] sm:$0xff]
      %v1676 = vld [vmem:[%s5 + $0x30] sm:$0xff]
      %v1677 = vld [vmem:[%s5 + $0x38] sm:$0xff]
      %v1678 = vld [vmem:[%s5 + $0x40] sm:$0xff]
      %v1679 = vld [vmem:[%s5 + $0x48] sm:$0xff]
      %v1680 = vld [vmem:[%s5 + $0x50] sm:$0xff]
      %v1681 = vld [vmem:[%s5 + $0x58] sm:$0xff]
      %v1682 = vld [vmem:[%s5 + $0x60] sm:$0xff]
      %v1683 = vld [vmem:[%s5 + $0x68] sm:$0xff]
      %v1684 = vld [vmem:[%s5 + $0x70] sm:$0xff]
      %v1685 = vld [vmem:[%s5 + $0x78] sm:$0xff]
      %v1686 = vld [vmem:[%s6] sm:$0xff]
      %v1687 = vld [vmem:[%s6 + $0x8] sm:$0xff]
      %v1688 = vld [vmem:[%s6 + $0x10] sm:$0xff]
      %v1689 = vld [vmem:[%s6 + $0x18] sm:$0xff]
      %v1690 = vld [vmem:[%s6 + $0x20] sm:$0xff]
      %v1691 = vld [vmem:[%s6 + $0x28] sm:$0xff]
      %v1692 = vld [vmem:[%s6 + $0x30] sm:$0xff]
      %v1693 = vld [vmem:[%s6 + $0x38] sm:$0xff]
      %v1694 = vld [vmem:[%s6 + $0x40] sm:$0xff]
      %v1695 = vld [vmem:[%s6 + $0x48] sm:$0xff]
      %v1696 = vld [vmem:[%s6 + $0x50] sm:$0xff]
      %v1697 = vld [vmem:[%s6 + $0x58] sm:$0xff]
      %v1698 = vld [vmem:[%s6 + $0x60] sm:$0xff]
      %v1699 = vld [vmem:[%s6 + $0x68] sm:$0xff]
      %v1700 = vld [vmem:[%s6 + $0x70] sm:$0xff]
      %v1701 = vld [vmem:[%s6 + $0x78] sm:$0xff]
      %1703 = vset.pattern.permute.xlu0 0
      %1704 = vperm.xlu0 %1703, %v1686
      %v1705 = vpop.permute.xlu0 %1704
      %1708 = vset.pattern.permute.xlu0 0
      %1709 = vperm.xlu0 %1708, %v1687
      %v1710 = vpop.permute.xlu0 %1709
      %1713 = vset.pattern.permute.xlu0 0
      %1714 = vperm.xlu0 %1713, %v1688
      %v1715 = vpop.permute.xlu0 %1714
      %1718 = vset.pattern.permute.xlu0 0
      %1719 = vperm.xlu0 %1718, %v1689
      %v1720 = vpop.permute.xlu0 %1719
      %1723 = vset.pattern.permute.xlu0 0
      %1724 = vperm.xlu0 %1723, %v1690
      %v1725 = vpop.permute.xlu0 %1724
      %1728 = vset.pattern.permute.xlu0 0
      %1729 = vperm.xlu0 %1728, %v1691
      %v1730 = vpop.permute.xlu0 %1729
      %1733 = vset.pattern.permute.xlu0 0
      %1734 = vperm.xlu0 %1733, %v1692
      %v1735 = vpop.permute.xlu0 %1734
      %1738 = vset.pattern.permute.xlu0 0
      %1739 = vperm.xlu0 %1738, %v1693
      %v1740 = vpop.permute.xlu0 %1739
      %1743 = vset.pattern.permute.xlu0 0
      %1744 = vperm.xlu0 %1743, %v1694
      %v1745 = vpop.permute.xlu0 %1744
      %1748 = vset.pattern.permute.xlu0 0
      %1749 = vperm.xlu0 %1748, %v1695
      %v1750 = vpop.permute.xlu0 %1749
      %1753 = vset.pattern.permute.xlu0 0
      %1754 = vperm.xlu0 %1753, %v1696
      %v1755 = vpop.permute.xlu0 %1754
      %1758 = vset.pattern.permute.xlu0 0
      %1759 = vperm.xlu0 %1758, %v1697
      %v1760 = vpop.permute.xlu0 %1759
      %1763 = vset.pattern.permute.xlu0 0
      %1764 = vperm.xlu0 %1763, %v1698
      %v1765 = vpop.permute.xlu0 %1764
      %1768 = vset.pattern.permute.xlu0 0
      %1769 = vperm.xlu0 %1768, %v1699
      %v1770 = vpop.permute.xlu0 %1769
      %1773 = vset.pattern.permute.xlu0 0
      %1774 = vperm.xlu0 %1773, %v1700
      %v1775 = vpop.permute.xlu0 %1774
      %1778 = vset.pattern.permute.xlu0 0
      %1779 = vperm.xlu0 %1778, %v1701
      %v1780 = vpop.permute.xlu0 %1779
      %1782 = vmatprep.subr.mxu0 %v1607
      %1783 = vmatpush1.msra.mxu0 %v1606
      %1784 = vmatprep.subr.mxu0 %v1611
      %1785 = vmatpush1.msra.mxu0 %v1610
      %1786 = vmatprep.subr.mxu0 %v1615
      %1787 = vmatpush1.msra.mxu0 %v1614
      %1788 = vmatprep.subr.mxu0 %v1619
      %1789 = vmatpush1.msra.mxu0 %v1618
      %1790 = vmatprep.subr.mxu0 %v1623
      %1791 = vmatpush1.msra.mxu0 %v1622
      %1792 = vmatprep.subr.mxu0 %v1627
      %1793 = vmatpush1.msra.mxu0 %v1626
      %1794 = vmatprep.subr.mxu0 %v1631
      %1795 = vmatpush1.msra.mxu0 %v1630
      %1796 = vmatprep.subr.mxu0 %v1635
      %1797 = vmatpush1.msra.mxu0 %v1634
      %1798 = vmatprep.subr.mxu0 %v1639
      %1799 = vmatpush1.msra.mxu0 %v1638
      %1800 = vmatprep.subr.mxu0 %v1643
      %1801 = vmatpush1.msra.mxu0 %v1642
      %1802 = vmatprep.subr.mxu0 %v1647
      %1803 = vmatpush1.msra.mxu0 %v1646
      %1804 = vmatprep.subr.mxu0 %v1651
      %1805 = vmatpush1.msra.mxu0 %v1650
      %1806 = vmatprep.subr.mxu0 %v1655
      %1807 = vmatpush1.msra.mxu0 %v1654
      %1808 = vmatprep.subr.mxu0 %v1659
      %1809 = vmatpush1.msra.mxu0 %v1658
      %1810 = vmatprep.subr.mxu0 %v1663
      %1811 = vmatpush1.msra.mxu0 %v1662
      %1812 = vmatprep.subr.mxu0 %v1667
      %1813 = vmatpush1.msra.mxu0 %v1666
      %1814 = vmatprep.subr.mxu0 0.0
      %1815 = vmatpush1.msra.mxu0 0.0
      %1816 = vmatprep.subr.mxu0 0.0
      %1817 = vmatpush1.msra.mxu0 0.0
      %1818 = vmatprep.subr.mxu0 0.0
      %1819 = vmatpush1.msra.mxu0 0.0
      %1820 = vmatprep.subr.mxu0 0.0
      %1821 = vmatpush1.msra.mxu0 0.0
      %1822 = vmatprep.subr.mxu0 0.0
      %1823 = vmatpush1.msra.mxu0 0.0
      %1824 = vmatprep.subr.mxu0 0.0
      %1825 = vmatpush1.msra.mxu0 0.0
      %1826 = vmatprep.subr.mxu0 0.0
      %1827 = vmatpush1.msra.mxu0 0.0
      %1828 = vmatprep.subr.mxu0 0.0
      %1829 = vmatpush1.msra.mxu0 0.0
      %1830 = vmatprep.subr.mxu0 0.0
      %1831 = vmatpush1.msra.mxu0 0.0
      %1832 = vmatprep.subr.mxu0 0.0
      %1833 = vmatpush1.msra.mxu0 0.0
      %1834 = vmatprep.subr.mxu0 0.0
      %1835 = vmatpush1.msra.mxu0 0.0
      %1836 = vmatprep.subr.mxu0 0.0
      %1837 = vmatpush1.msra.mxu0 0.0
      %1838 = vmatprep.subr.mxu0 0.0
      %1839 = vmatpush1.msra.mxu0 0.0
      %1840 = vmatprep.subr.mxu0 0.0
      %1841 = vmatpush1.msra.mxu0 0.0
      %1842 = vmatprep.subr.mxu0 0.0
      %1843 = vmatpush1.msra.mxu0 0.0
      %1844 = vmatprep.subr.mxu0 0.0
      %1845 = vmatpush1.msra.mxu0 0.0
      %1846 = vmatprep.mubr.f32.mxu0 0.0
      %1847 = vmatmul.mubr.f32.gmra.mrb[0].mxu0 %v1670
      %v1848 = vpop.f32.mrb[0].mxu0
      %v1849 = vadd.f32 %v1705, %v1848
      %v1850 = vpop.f32.mrb[0].mxu0
      %v1851 = vadd.f32 %v1705, %v1850
      %1852 = vmatprep.mubr.f32.mxu0 0.0
      %1853 = vmatmul.mubr.f32.gmra.mrb[0].mxu0 %v1671
      %v1854 = vpop.f32.mrb[0].mxu0
      %v1855 = vadd.f32 %v1710, %v1854
      %v1856 = vpop.f32.mrb[0].mxu0
      %v1857 = vadd.f32 %v1710, %v1856
      %1858 = vmatprep.mubr.f32.mxu0 0.0
      %1859 = vmatmul.mubr.f32.gmra.mrb[0].mxu0 %v1672
      %v1860 = vpop.f32.mrb[0].mxu0
      %v1861 = vadd.f32 %v1715, %v1860
      %v1862 = vpop.f32.mrb[0].mxu0
      %v1863 = vadd.f32 %v1715, %v1862
      %1864 = vmatprep.mubr.f32.mxu0 0.0
      %1865 = vmatmul.mubr.f32.gmra.mrb[0].mxu0 %v1673
      %v1866 = vpop.f32.mrb[0].mxu0
      %v1867 = vadd.f32 %v1720, %v1866
      %v1868 = vpop.f32.mrb[0].mxu0
      %v1869 = vadd.f32 %v1720, %v1868
      %1870 = vmatprep.mubr.f32.mxu0 0.0
      %1871 = vmatmul.mubr.f32.gmra.mrb[0].mxu0 %v1674
      %v1872 = vpop.f32.mrb[0].mxu0
      %v1873 = vadd.f32 %v1725, %v1872
      %v1874 = vpop.f32.mrb[0].mxu0
      %v1875 = vadd.f32 %v1725, %v1874
      %1876 = vmatprep.mubr.f32.mxu0 0.0
      %1877 = vmatmul.mubr.f32.gmra.mrb[0].mxu0 %v1675
      %v1878 = vpop.f32.mrb[0].mxu0
      %v1879 = vadd.f32 %v1730, %v1878
      %v1880 = vpop.f32.mrb[0].mxu0
      %v1881 = vadd.f32 %v1730, %v1880
      %1882 = vmatprep.mubr.f32.mxu0 0.0
      %1883 = vmatmul.mubr.f32.gmra.mrb[0].mxu0 %v1676
      %v1884 = vpop.f32.mrb[0].mxu0
      %v1885 = vadd.f32 %v1735, %v1884
      %v1886 = vpop.f32.mrb[0].mxu0
      %v1887 = vadd.f32 %v1735, %v1886
      %1888 = vmatprep.mubr.f32.mxu0 0.0
      %1889 = vmatmul.mubr.f32.gmra.mrb[0].mxu0 %v1677
      %v1890 = vpop.f32.mrb[0].mxu0
      %v1891 = vadd.f32 %v1740, %v1890
      %v1892 = vpop.f32.mrb[0].mxu0
      %v1893 = vadd.f32 %v1740, %v1892
      %1894 = vmatprep.mubr.f32.mxu0 0.0
      %1895 = vmatmul.mubr.f32.gmra.mrb[0].mxu0 %v1678
      %v1896 = vpop.f32.mrb[0].mxu0
      %v1897 = vadd.f32 %v1745, %v1896
      %v1898 = vpop.f32.mrb[0].mxu0
      %v1899 = vadd.f32 %v1745, %v1898
      %1900 = vmatprep.mubr.f32.mxu0 0.0
      %1901 = vmatmul.mubr.f32.gmra.mrb[0].mxu0 %v1679
      %v1902 = vpop.f32.mrb[0].mxu0
      %v1903 = vadd.f32 %v1750, %v1902
      %v1904 = vpop.f32.mrb[0].mxu0
      %v1905 = vadd.f32 %v1750, %v1904
      %1906 = vmatprep.mubr.f32.mxu0 0.0
      %1907 = vmatmul.mubr.f32.gmra.mrb[0].mxu0 %v1680
      %v1908 = vpop.f32.mrb[0].mxu0
      %v1909 = vadd.f32 %v1755, %v1908
      %v1910 = vpop.f32.mrb[0].mxu0
      %v1911 = vadd.f32 %v1755, %v1910
      %1912 = vmatprep.mubr.f32.mxu0 0.0
      %1913 = vmatmul.mubr.f32.gmra.mrb[0].mxu0 %v1681
      %v1914 = vpop.f32.mrb[0].mxu0
      %v1915 = vadd.f32 %v1760, %v1914
      %v1916 = vpop.f32.mrb[0].mxu0
      %v1917 = vadd.f32 %v1760, %v1916
      %1918 = vmatprep.mubr.f32.mxu0 0.0
      %1919 = vmatmul.mubr.f32.gmra.mrb[0].mxu0 %v1682
      %v1920 = vpop.f32.mrb[0].mxu0
      %v1921 = vadd.f32 %v1765, %v1920
      %v1922 = vpop.f32.mrb[0].mxu0
      %v1923 = vadd.f32 %v1765, %v1922
      %1924 = vmatprep.mubr.f32.mxu0 0.0
      %1925 = vmatmul.mubr.f32.gmra.mrb[0].mxu0 %v1683
      %v1926 = vpop.f32.mrb[0].mxu0
      %v1927 = vadd.f32 %v1770, %v1926
      %v1928 = vpop.f32.mrb[0].mxu0
      %v1929 = vadd.f32 %v1770, %v1928
      %1930 = vmatprep.mubr.f32.mxu0 0.0
      %1931 = vmatmul.mubr.f32.gmra.mrb[0].mxu0 %v1684
      %v1932 = vpop.f32.mrb[0].mxu0
      %v1933 = vadd.f32 %v1775, %v1932
      %v1934 = vpop.f32.mrb[0].mxu0
      %v1935 = vadd.f32 %v1775, %v1934
      %1936 = vmatprep.mubr.f32.mxu0 0.0
      %1937 = vmatmul.mubr.f32.gmra.mrb[0].mxu0 %v1685
      %v1938 = vpop.f32.mrb[0].mxu0
      %v1939 = vadd.f32 %v1780, %v1938
      %v1940 = vpop.f32.mrb[0].mxu0
      %v1941 = vadd.f32 %v1780, %v1940
      %1942 = vdwg.mxu0
      %1943 = vmatprep.subr.mxu0 %v1609
      %1944 = vmatpush1.msra.mxu0 %v1608
      %1945 = vmatprep.subr.mxu0 %v1613
      %1946 = vmatpush1.msra.mxu0 %v1612
      %1947 = vmatprep.subr.mxu0 %v1617
      %1948 = vmatpush1.msra.mxu0 %v1616
      %1949 = vmatprep.subr.mxu0 %v1621
      %1950 = vmatpush1.msra.mxu0 %v1620
      %1951 = vmatprep.subr.mxu0 %v1625
      %1952 = vmatpush1.msra.mxu0 %v1624
      %1953 = vmatprep.subr.mxu0 %v1629
      %1954 = vmatpush1.msra.mxu0 %v1628
      %1955 = vmatprep.subr.mxu0 %v1633
      %1956 = vmatpush1.msra.mxu0 %v1632
      %1957 = vmatprep.subr.mxu0 %v1637
      %1958 = vmatpush1.msra.mxu0 %v1636
      %1959 = vmatprep.subr.mxu0 %v1641
      %1960 = vmatpush1.msra.mxu0 %v1640
      %1961 = vmatprep.subr.mxu0 %v1645
      %1962 = vmatpush1.msra.mxu0 %v1644
      %1963 = vmatprep.subr.mxu0 %v1649
      %1964 = vmatpush1.msra.mxu0 %v1648
      %1965 = vmatprep.subr.mxu0 %v1653
      %1966 = vmatpush1.msra.mxu0 %v1652
      %1967 = vmatprep.subr.mxu0 %v1657
      %1968 = vmatpush1.msra.mxu0 %v1656
      %1969 = vmatprep.subr.mxu0 %v1661
      %1970 = vmatpush1.msra.mxu0 %v1660
      %1971 = vmatprep.subr.mxu0 %v1665
      %1972 = vmatpush1.msra.mxu0 %v1664
      %1973 = vmatprep.subr.mxu0 %v1669
      %1974 = vmatpush1.msra.mxu0 %v1668
      %1975 = vmatprep.subr.mxu0 0.0
      %1976 = vmatpush1.msra.mxu0 0.0
      %1977 = vmatprep.subr.mxu0 0.0
      %1978 = vmatpush1.msra.mxu0 0.0
      %1979 = vmatprep.subr.mxu0 0.0
      %1980 = vmatpush1.msra.mxu0 0.0
      %1981 = vmatprep.subr.mxu0 0.0
      %1982 = vmatpush1.msra.mxu0 0.0
      %1983 = vmatprep.subr.mxu0 0.0
      %1984 = vmatpush1.msra.mxu0 0.0
      %1985 = vmatprep.subr.mxu0 0.0
      %1986 = vmatpush1.msra.mxu0 0.0
      %1987 = vmatprep.subr.mxu0 0.0
      %1988 = vmatpush1.msra.mxu0 0.0
      %1989 = vmatprep.subr.mxu0 0.0
      %1990 = vmatpush1.msra.mxu0 0.0
      %1991 = vmatprep.subr.mxu0 0.0
      %1992 = vmatpush1.msra.mxu0 0.0
      %1993 = vmatprep.subr.mxu0 0.0
      %1994 = vmatpush1.msra.mxu0 0.0
      %1995 = vmatprep.subr.mxu0 0.0
      %1996 = vmatpush1.msra.mxu0 0.0
      %1997 = vmatprep.subr.mxu0 0.0
      %1998 = vmatpush1.msra.mxu0 0.0
      %1999 = vmatprep.subr.mxu0 0.0
      %2000 = vmatpush1.msra.mxu0 0.0
      %2001 = vmatprep.subr.mxu0 0.0
      %2002 = vmatpush1.msra.mxu0 0.0
      %2003 = vmatprep.subr.mxu0 0.0
      %2004 = vmatpush1.msra.mxu0 0.0
      %2005 = vmatprep.subr.mxu0 0.0
      %2006 = vmatpush1.msra.mxu0 0.0
      %2007 = vmatprep.mubr.f32.mxu0 0.0
      %2008 = vmatmul.mubr.f32.gmra.mrb[0].mxu0 %v1670
      %v2009 = vpop.f32.mrb[0].mxu0
      %v2010 = vadd.f32 %v1705, %v2009
      %v2011 = vpop.f32.mrb[0].mxu0
      %v2012 = vadd.f32 %v1705, %v2011
      %2013 = vmatprep.mubr.f32.mxu0 0.0
      %2014 = vmatmul.mubr.f32.gmra.mrb[0].mxu0 %v1671
      %v2015 = vpop.f32.mrb[0].mxu0
      %v2016 = vadd.f32 %v1710, %v2015
      %v2017 = vpop.f32.mrb[0].mxu0
      %v2018 = vadd.f32 %v1710, %v2017
      %2019 = vmatprep.mubr.f32.mxu0 0.0
      %2020 = vmatmul.mubr.f32.gmra.mrb[0].mxu0 %v1672
      %v2021 = vpop.f32.mrb[0].mxu0
      %v2022 = vadd.f32 %v1715, %v2021
      %v2023 = vpop.f32.mrb[0].mxu0
      %v2024 = vadd.f32 %v1715, %v2023
      %2025 = vmatprep.mubr.f32.mxu0 0.0
      %2026 = vmatmul.mubr.f32.gmra.mrb[0].mxu0 %v1673
      %v2027 = vpop.f32.mrb[0].mxu0
      %v2028 = vadd.f32 %v1720, %v2027
      %v2029 = vpop.f32.mrb[0].mxu0
      %v2030 = vadd.f32 %v1720, %v2029
      %2031 = vmatprep.mubr.f32.mxu0 0.0
      %2032 = vmatmul.mubr.f32.gmra.mrb[0].mxu0 %v1674
      %v2033 = vpop.f32.mrb[0].mxu0
      %v2034 = vadd.f32 %v1725, %v2033
      %v2035 = vpop.f32.mrb[0].mxu0
      %v2036 = vadd.f32 %v1725, %v2035
      %2037 = vmatprep.mubr.f32.mxu0 0.0
      %2038 = vmatmul.mubr.f32.gmra.mrb[0].mxu0 %v1675
      %v2039 = vpop.f32.mrb[0].mxu0
      %v2040 = vadd.f32 %v1730, %v2039
      %v2041 = vpop.f32.mrb[0].mxu0
      %v2042 = vadd.f32 %v1730, %v2041
      %2043 = vmatprep.mubr.f32.mxu0 0.0
      %2044 = vmatmul.mubr.f32.gmra.mrb[0].mxu0 %v1676
      %v2045 = vpop.f32.mrb[0].mxu0
      %v2046 = vadd.f32 %v1735, %v2045
      %v2047 = vpop.f32.mrb[0].mxu0
      %v2048 = vadd.f32 %v1735, %v2047
      %2049 = vmatprep.mubr.f32.mxu0 0.0
      %2050 = vmatmul.mubr.f32.gmra.mrb[0].mxu0 %v1677
      %v2051 = vpop.f32.mrb[0].mxu0
      %v2052 = vadd.f32 %v1740, %v2051
      %v2053 = vpop.f32.mrb[0].mxu0
      %v2054 = vadd.f32 %v1740, %v2053
      %2055 = vmatprep.mubr.f32.mxu0 0.0
      %2056 = vmatmul.mubr.f32.gmra.mrb[0].mxu0 %v1678
      %v2057 = vpop.f32.mrb[0].mxu0
      %v2058 = vadd.f32 %v1745, %v2057
      %v2059 = vpop.f32.mrb[0].mxu0
      %v2060 = vadd.f32 %v1745, %v2059
      %2061 = vmatprep.mubr.f32.mxu0 0.0
      %2062 = vmatmul.mubr.f32.gmra.mrb[0].mxu0 %v1679
      %v2063 = vpop.f32.mrb[0].mxu0
      %v2064 = vadd.f32 %v1750, %v2063
      %v2065 = vpop.f32.mrb[0].mxu0
      %v2066 = vadd.f32 %v1750, %v2065
      %2067 = vmatprep.mubr.f32.mxu0 0.0
      %2068 = vmatmul.mubr.f32.gmra.mrb[0].mxu0 %v1680
      %v2069 = vpop.f32.mrb[0].mxu0
      %v2070 = vadd.f32 %v1755, %v2069
      %v2071 = vpop.f32.mrb[0].mxu0
      %v2072 = vadd.f32 %v1755, %v2071
      %2073 = vmatprep.mubr.f32.mxu0 0.0
      %2074 = vmatmul.mubr.f32.gmra.mrb[0].mxu0 %v1681
      %v2075 = vpop.f32.mrb[0].mxu0
      %v2076 = vadd.f32 %v1760, %v2075
      %v2077 = vpop.f32.mrb[0].mxu0
      %v2078 = vadd.f32 %v1760, %v2077
      %2079 = vmatprep.mubr.f32.mxu0 0.0
      %2080 = vmatmul.mubr.f32.gmra.mrb[0].mxu0 %v1682
      %v2081 = vpop.f32.mrb[0].mxu0
      %v2082 = vadd.f32 %v1765, %v2081
      %v2083 = vpop.f32.mrb[0].mxu0
      %v2084 = vadd.f32 %v1765, %v2083
      %2085 = vmatprep.mubr.f32.mxu0 0.0
      %2086 = vmatmul.mubr.f32.gmra.mrb[0].mxu0 %v1683
      %v2087 = vpop.f32.mrb[0].mxu0
      %v2088 = vadd.f32 %v1770, %v2087
      %v2089 = vpop.f32.mrb[0].mxu0
      %v2090 = vadd.f32 %v1770, %v2089
      %2091 = vmatprep.mubr.f32.mxu0 0.0
      %2092 = vmatmul.mubr.f32.gmra.mrb[0].mxu0 %v1684
      %v2093 = vpop.f32.mrb[0].mxu0
      %v2094 = vadd.f32 %v1775, %v2093
      %v2095 = vpop.f32.mrb[0].mxu0
      %v2096 = vadd.f32 %v1775, %v2095
      %2097 = vmatprep.mubr.f32.mxu0 0.0
      %2098 = vmatmul.mubr.f32.gmra.mrb[0].mxu0 %v1685
      %v2099 = vpop.f32.mrb[0].mxu0
      %v2100 = vadd.f32 %v1780, %v2099
      %v2101 = vpop.f32.mrb[0].mxu0
      %v2102 = vadd.f32 %v1780, %v2101
      %2103 = vdwg.mxu0
      %v2104 = vtanh.pop %v1849
      %v2105 = vtanh.pop %v1851
      %v2106 = vtanh.pop %v2010
      %v2107 = vtanh.pop %v2012
      %v2108 = vtanh.pop %v1855
      %v2109 = vtanh.pop %v1857
      %v2110 = vtanh.pop %v2016
      %v2111 = vtanh.pop %v2018
      %v2112 = vtanh.pop %v1861
      %v2113 = vtanh.pop %v1863
      %v2114 = vtanh.pop %v2022
      %v2115 = vtanh.pop %v2024
      %v2116 = vtanh.pop %v1867
      %v2117 = vtanh.pop %v1869
      %v2118 = vtanh.pop %v2028
      %v2119 = vtanh.pop %v2030
      %v2120 = vtanh.pop %v1873
      %v2121 = vtanh.pop %v1875
      %v2122 = vtanh.pop %v2034
      %v2123 = vtanh.pop %v2036
      %v2124 = vtanh.pop %v1879
      %v2125 = vtanh.pop %v1881
      %v2126 = vtanh.pop %v2040
      %v2127 = vtanh.pop %v2042
      %v2128 = vtanh.pop %v1885
      %v2129 = vtanh.pop %v1887
      %v2130 = vtanh.pop %v2046
      %v2131 = vtanh.pop %v2048
      %v2132 = vtanh.pop %v1891
      %v2133 = vtanh.pop %v1893
      %v2134 = vtanh.pop %v2052
      %v2135 = vtanh.pop %v2054
      %v2136 = vtanh.pop %v1897
      %v2137 = vtanh.pop %v1899
      %v2138 = vtanh.pop %v2058
      %v2139 = vtanh.pop %v2060
      %v2140 = vtanh.pop %v1903
      %v2141 = vtanh.pop %v1905
      %v2142 = vtanh.pop %v2064
      %v2143 = vtanh.pop %v2066
      %v2144 = vtanh.pop %v1909
      %v2145 = vtanh.pop %v1911
      %v2146 = vtanh.pop %v2070
      %v2147 = vtanh.pop %v2072
      %v2148 = vtanh.pop %v1915
      %v2149 = vtanh.pop %v1917
      %v2150 = vtanh.pop %v2076
      %v2151 = vtanh.pop %v2078
      %v2152 = vtanh.pop %v1921
      %v2153 = vtanh.pop %v1923
      %v2154 = vtanh.pop %v2082
      %v2155 = vtanh.pop %v2084
      %v2156 = vtanh.pop %v1927
      %v2157 = vtanh.pop %v1929
      %v2158 = vtanh.pop %v2088
      %v2159 = vtanh.pop %v2090
      %v2160 = vtanh.pop %v1933
      %v2161 = vtanh.pop %v1935
      %v2162 = vtanh.pop %v2094
      %v2163 = vtanh.pop %v2096
      %v2164 = vtanh.pop %v1939
      %v2165 = vtanh.pop %v1941
      %v2166 = vtanh.pop %v2100
      %v2167 = vtanh.pop %v2102
      %v2168 = vld [vmem:[%s7] sm:$0xff]
      %v2169 = vld [vmem:[%s8] sm:$0xff]
      %2171 = vset.pattern.permute.xlu0 0
      %2172 = vperm.xlu0 %2171, %v2169
      %v2173 = vpop.permute.xlu0 %2172
      %2175 = vmatprep.subr.mxu0 %v2105
      %2176 = vmatpush1.msra.mxu0 %v2104
      %2177 = vmatprep.subr.mxu0 %v2109
      %2178 = vmatpush1.msra.mxu0 %v2108
      %2179 = vmatprep.subr.mxu0 %v2113
      %2180 = vmatpush1.msra.mxu0 %v2112
      %2181 = vmatprep.subr.mxu0 %v2117
      %2182 = vmatpush1.msra.mxu0 %v2116
      %2183 = vmatprep.subr.mxu0 %v2121
      %2184 = vmatpush1.msra.mxu0 %v2120
      %2185 = vmatprep.subr.mxu0 %v2125
      %2186 = vmatpush1.msra.mxu0 %v2124
      %2187 = vmatprep.subr.mxu0 %v2129
      %2188 = vmatpush1.msra.mxu0 %v2128
      %2189 = vmatprep.subr.mxu0 %v2133
      %2190 = vmatpush1.msra.mxu0 %v2132
      %2191 = vmatprep.subr.mxu0 %v2137
      %2192 = vmatpush1.msra.mxu0 %v2136
      %2193 = vmatprep.subr.mxu0 %v2141
      %2194 = vmatpush1.msra.mxu0 %v2140
      %2195 = vmatprep.subr.mxu0 %v2145
      %2196 = vmatpush1.msra.mxu0 %v2144
      %2197 = vmatprep.subr.mxu0 %v2149
      %2198 = vmatpush1.msra.mxu0 %v2148
      %2199 = vmatprep.subr.mxu0 %v2153
      %2200 = vmatpush1.msra.mxu0 %v2152
      %2201 = vmatprep.subr.mxu0 %v2157
      %2202 = vmatpush1.msra.mxu0 %v2156
      %2203 = vmatprep.subr.mxu0 %v2161
      %2204 = vmatpush1.msra.mxu0 %v2160
      %2205 = vmatprep.subr.mxu0 %v2165
      %2206 = vmatpush1.msra.mxu0 %v2164
      %2207 = vmatprep.subr.mxu0 0.0
      %2208 = vmatpush1.msra.mxu0 0.0
      %2209 = vmatprep.subr.mxu0 0.0
      %2210 = vmatpush1.msra.mxu0 0.0
      %2211 = vmatprep.subr.mxu0 0.0
      %2212 = vmatpush1.msra.mxu0 0.0
      %2213 = vmatprep.subr.mxu0 0.0
      %2214 = vmatpush1.msra.mxu0 0.0
      %2215 = vmatprep.subr.mxu0 0.0
      %2216 = vmatpush1.msra.mxu0 0.0
      %2217 = vmatprep.subr.mxu0 0.0
      %2218 = vmatpush1.msra.mxu0 0.0
      %2219 = vmatprep.subr.mxu0 0.0
      %2220 = vmatpush1.msra.mxu0 0.0
      %2221 = vmatprep.subr.mxu0 0.0
      %2222 = vmatpush1.msra.mxu0 0.0
      %2223 = vmatprep.subr.mxu0 0.0
      %2224 = vmatpush1.msra.mxu0 0.0
      %2225 = vmatprep.subr.mxu0 0.0
      %2226 = vmatpush1.msra.mxu0 0.0
      %2227 = vmatprep.subr.mxu0 0.0
      %2228 = vmatpush1.msra.mxu0 0.0
      %2229 = vmatprep.subr.mxu0 0.0
      %2230 = vmatpush1.msra.mxu0 0.0
      %2231 = vmatprep.subr.mxu0 0.0
      %2232 = vmatpush1.msra.mxu0 0.0
      %2233 = vmatprep.subr.mxu0 0.0
      %2234 = vmatpush1.msra.mxu0 0.0
      %2235 = vmatprep.subr.mxu0 0.0
      %2236 = vmatpush1.msra.mxu0 0.0
      %2237 = vmatprep.subr.mxu0 0.0
      %2238 = vmatpush1.msra.mxu0 0.0
      %2239 = vmatprep.mubr.f32.mxu0 0.0
      %2240 = vmatmul.mubr.f32.gmra.mrb[0].mxu0 %v2168
      %v2241 = vpop.f32.mrb[0].mxu0
      %v2242 = vadd.f32 %v2173, %v2241
      %v2243 = vpop.f32.mrb[0].mxu0
      %v2244 = vadd.f32 %v2173, %v2243
      %2245 = vdwg.mxu0
      %2246 = vmatprep.subr.mxu0 %v2107
      %2247 = vmatpush1.msra.mxu0 %v2106
      %2248 = vmatprep.subr.mxu0 %v2111
      %2249 = vmatpush1.msra.mxu0 %v2110
      %2250 = vmatprep.subr.mxu0 %v2115
      %2251 = vmatpush1.msra.mxu0 %v2114
      %2252 = vmatprep.subr.mxu0 %v2119
      %2253 = vmatpush1.msra.mxu0 %v2118
      %2254 = vmatprep.subr.mxu0 %v2123
      %2255 = vmatpush1.msra.mxu0 %v2122
      %2256 = vmatprep.subr.mxu0 %v2127
      %2257 = vmatpush1.msra.mxu0 %v2126
      %2258 = vmatprep.subr.mxu0 %v2131
      %2259 = vmatpush1.msra.mxu0 %v2130
      %2260 = vmatprep.subr.mxu0 %v2135
      %2261 = vmatpush1.msra.mxu0 %v2134
      %2262 = vmatprep.subr.mxu0 %v2139
      %2263 = vmatpush1.msra.mxu0 %v2138
      %2264 = vmatprep.subr.mxu0 %v2143
      %2265 = vmatpush1.msra.mxu0 %v2142
      %2266 = vmatprep.subr.mxu0 %v2147
      %2267 = vmatpush1.msra.mxu0 %v2146
      %2268 = vmatprep.subr.mxu0 %v2151
      %2269 = vmatpush1.msra.mxu0 %v2150
      %2270 = vmatprep.subr.mxu0 %v2155
      %2271 = vmatpush1.msra.mxu0 %v2154
      %2272 = vmatprep.subr.mxu0 %v2159
      %2273 = vmatpush1.msra.mxu0 %v2158
      %2274 = vmatprep.subr.mxu0 %v2163
      %2275 = vmatpush1.msra.mxu0 %v2162
      %2276 = vmatprep.subr.mxu0 %v2167
      %2277 = vmatpush1.msra.mxu0 %v2166
      %2278 = vmatprep.subr.mxu0 0.0
      %2279 = vmatpush1.msra.mxu0 0.0
      %2280 = vmatprep.subr.mxu0 0.0
      %2281 = vmatpush1.msra.mxu0 0.0
      %2282 = vmatprep.subr.mxu0 0.0
      %2283 = vmatpush1.msra.mxu0 0.0
      %2284 = vmatprep.subr.mxu0 0.0
      %2285 = vmatpush1.msra.mxu0 0.0
      %2286 = vmatprep.subr.mxu0 0.0
      %2287 = vmatpush1.msra.mxu0 0.0
      %2288 = vmatprep.subr.mxu0 0.0
      %2289 = vmatpush1.msra.mxu0 0.0
      %2290 = vmatprep.subr.mxu0 0.0
      %2291 = vmatpush1.msra.mxu0 0.0
      %2292 = vmatprep.subr.mxu0 0.0
      %2293 = vmatpush1.msra.mxu0 0.0
      %2294 = vmatprep.subr.mxu0 0.0
      %2295 = vmatpush1.msra.mxu0 0.0
      %2296 = vmatprep.subr.mxu0 0.0
      %2297 = vmatpush1.msra.mxu0 0.0
      %2298 = vmatprep.subr.mxu0 0.0
      %2299 = vmatpush1.msra.mxu0 0.0
      %2300 = vmatprep.subr.mxu0 0.0
      %2301 = vmatpush1.msra.mxu0 0.0
      %2302 = vmatprep.subr.mxu0 0.0
      %2303 = vmatpush1.msra.mxu0 0.0
      %2304 = vmatprep.subr.mxu0 0.0
      %2305 = vmatpush1.msra.mxu0 0.0
      %2306 = vmatprep.subr.mxu0 0.0
      %2307 = vmatpush1.msra.mxu0 0.0
      %2308 = vmatprep.subr.mxu0 0.0
      %2309 = vmatpush1.msra.mxu0 0.0
      %2310 = vmatprep.mubr.f32.mxu0 0.0
      %2311 = vmatmul.mubr.f32.gmra.mrb[0].mxu0 %v2168
      %v2312 = vpop.f32.mrb[0].mxu0
      %v2313 = vadd.f32 %v2173, %v2312
      %v2314 = vpop.f32.mrb[0].mxu0
      %v2315 = vadd.f32 %v2173, %v2314
      %2316 = vdwg.mxu0
      %2317 = vst [vmem:[%s334] sm:$0xff] %v2242
      %2318 = vst [vmem:[%s334 + $0x8] sm:$0xff] %v2244
      %2319 = vst [vmem:[%s334 + $0x10] sm:$0xff] %v2313
      %2320 = vst [vmem:[%s334 + $0x18] sm:$0xff] %v2315
      %s2321 = smul.u32 4, %s20
      %p2322 = scmp.lt.s32.totalorder %s2321, 7
      %s2323 = scalar_select %p2322, %s2321, 7
      %s2324 = smul.addr %s2323, 8
      %s2325 = scalar_lea.vmem %s9, %s2324
      // Predicated region
      $region57: #{pinn_forward.1} parent=55 // pred_check
        %p2326 = pneg %p232
      $region58: #{pinn_forward.1} parent=55 // pred_check_branch
        %2328 = sbr.rel (%p2326) target = $region60
      $region59: #{pinn_forward.1} parent=55 // pred_region
        %s2329 = smul.u32 4, %s20
      $region60: #{pinn_forward.1} parent=55 // pred_fallthru
        _
    $region56: #{pinn_forward.1} parent=5 // pred_fallthru
      _
    %p2330 = scmp.le.s32.totalorder 2, %s15
    // Predicated region
    $region61: #{pinn_forward.1} parent=5 // pred_check
      %p2331 = pneg %p2330
    $region62: #{pinn_forward.1} parent=5 // pred_check_branch
      %2333 = sbr.rel (%p2331) target = $region64
    $region63: #{pinn_forward.1} parent=5 // pred_region
      %s2334 = ssub.s32 %s15, 2
      // Predicated region
      $region65: #{pinn_forward.1} parent=63 // pred_check
        %p2335 = pneg %p238
      $region66: #{pinn_forward.1} parent=63 // pred_check_branch
        %2337 = sbr.rel (%p2335) target = $region68
      $region67: #{pinn_forward.1} parent=63 // pred_region
        %s2338 = smul.u32 4, %s21
        %p2339 = scmp.lt.s32.totalorder %s2338, 7
        %s2340 = scalar_select %p2339, %s2338, 7
        %s2341 = smul.addr %s2340, 8
        %s2342 = scalar_lea.vmem %s9, %s2341
      $region68: #{pinn_forward.1} parent=63 // pred_fallthru
        _
    $region64: #{pinn_forward.1} parent=5 // pred_fallthru
      _
  $region6: #{pinn_forward.1} parent=0 // loop_footer
    %s19 = sadd.s32 1, %s15
  $region7: #{pinn_forward.1} parent=0 // loop_footer_branch
    %14 = sbr.rel target = $region3
  $region8: #{pinn_forward.1} parent=0 // loop_exit
    _

</llo_original>
